<compile_context>
chip_gen: v7x
topology: tpu7x:2x2x1
jax: 0.10.0
libtpu: 0.0.40
codegen_flags: <defaults>
</compile_context>

<pallas_src>
import functools

import jax
import jax.numpy as jnp
from jax.experimental import pallas as pl
from jax.experimental.pallas import tpu as pltpu


def _round_up(n, m):
    return ((n + m - 1) // m) * m


# ----------------------------------------------------------------------------
# Fused Pallas kernel: num_layers bidirectional tanh-RNN layers + Linear
# ----------------------------------------------------------------------------
def fused_rnn_classifier_kernel(x_ref, *refs, num_layers):
    """Per grid program:
      x_ref   : (T, Bb, Din) f32, time-major
      per layer l: w_ih (Din_l, 2Hp), w_hh_blk (2Hp, 2Hp), b (1, 2Hp)
      w_lin   : (2Hp, Opad), b_lin (1, Opad)
      out_ref : (T, Bb, Opad) f32
      ih_scr  : (T, Bb, 2Hp) f32 VMEM scratch (hoisted input projection)
      h_scr   : (T, Bb, 2Hp) f32 VMEM scratch (time-aligned hidden states)
    """
    layer_refs = refs[: 3 * num_layers]
    w_lin_ref, b_lin_ref, out_ref, ih_scr, h_scr = refs[3 * num_layers:]

    T, Bb, _ = x_ref.shape
    H2 = h_scr.shape[-1]
    Hp = H2 // 2

    # Lane masks for the fwd / bwd halves (hoisted once; not re-broadcast).
    fwd_mask = jax.lax.broadcasted_iota(jnp.int32, (Bb, H2), 1) < Hp
    bwd_mask = jnp.logical_not(fwd_mask)

    act = x_ref[...].reshape(T * Bb, x_ref.shape[-1])   # rows in (t, b) order

    for l in range(num_layers):
        w_ih = layer_refs[3 * l][...]                   # (Din_l, 2Hp)
        w_hh = layer_refs[3 * l + 1][...]               # (2Hp, 2Hp) block-diag
        bias = layer_refs[3 * l + 2][...]               # (1, 2Hp) f32
        cdt = w_ih.dtype                                # bf16 (MXU-native) / f32

        # Hoisted input projection: ONE matmul for the whole sequence and
        # both directions; bias folded in once; parked time-aligned in VMEM.
        ih = jnp.dot(act.astype(cdt), w_ih,
                     preferred_element_type=jnp.float32) + bias
        ih_scr[...] = ih.reshape(T, Bb, H2)

        def step(s, h_cat):
            # fwd half consumes ih(t=s), bwd half consumes ih(t=T-1-s).
            # Both loads + the select are independent of the carry, so they
            # sit off the serial matmul->tanh dependency chain.
            ih_step = jnp.where(fwd_mask, ih_scr[s], ih_scr[T - 1 - s])
            h_new = jnp.tanh(                           # tanh kept in f32 (v5e)
                ih_step + jnp.dot(h_cat.astype(cdt), w_hh,
                                  preferred_element_type=jnp.float32))
            # Write each half at its time-aligned row so the layer output is
            # directly consumable downstream (no flip / stack / concat).
            pltpu.store(h_scr.at[s], h_new, mask=fwd_mask)
            pltpu.store(h_scr.at[T - 1 - s], h_new, mask=bwd_mask)
            return h_new

        jax.lax.fori_loop(0, T, step, jnp.zeros((Bb, H2), jnp.float32),
                          unroll=min(T, 8))

        act = h_scr[...].reshape(T * Bb, H2)            # time-aligned, in VMEM

    # Final Linear; output slab is lane-dense (Opad multiple of 128).
    out = jnp.dot(act.astype(w_lin_ref.dtype), w_lin_ref[...],
                  preferred_element_type=jnp.float32) + b_lin_ref[...]
    out_ref[...] = out.reshape(T, Bb, -1)


# ----------------------------------------------------------------------------
# Wrapper: one pallas_call for the whole forward pass
# ----------------------------------------------------------------------------
@functools.partial(
    jax.jit, static_argnames=("num_layers", "output_size", "batch_block"))
def rnn_classifier_forward(x, fused_params, num_layers, output_size,
                           batch_block=None):
    """Equivalent of RNNClassifier.forward (batch_first bidirectional tanh RNN
    stack + Linear).  Returns (B, T, output_size) float32."""
    B, T, Din = x.shape
    H2 = fused_params["w_hh_blk_l0"].shape[1]
    Opad = fused_params["w_lin"].shape[1]

    # Pad batch to the 8-sublane minimum so the recurrence carry fills vreg
    # sublanes / MXU rows.  Single program is optimal on single-TC v5e/v6e;
    # on v7x pass batch_block = Bp // 2 (once Bp >= 16) to use both cores.
    Bp = _round_up(max(B, 8), 8)
    if batch_block is None:
        batch_block = Bp
    assert batch_block % 8 == 0 and Bp % batch_block == 0
    n_blocks = Bp // batch_block

    x_tm = jnp.transpose(x.astype(jnp.float32), (1, 0, 2))      # (T, B, Din)
    if Bp != B:
        x_tm = jnp.pad(x_tm, ((0, 0), (0, Bp - B), (0, 0)))

    args = [x_tm]
    in_specs = [pl.BlockSpec((T, batch_block, Din), lambda i: (0, i, 0))]
    weight_bytes = 0
    names = []
    for l in range(num_layers):
        names += [f"w_ih_cat_l{l}", f"w_hh_blk_l{l}", f"b_cat_l{l}"]
    names += ["w_lin", "b_lin"]
    for name in names:
        w = fused_params[name]
        args.append(w)
        in_specs.append(pl.BlockSpec(w.shape, lambda i: (0, 0)))
        weight_bytes += w.size * w.dtype.itemsize

    # Explicit VMEM budget (v7x has only 64 MiB per TensorCore).
    est = 4 * (2 * T * batch_block * Din + 2 * T * batch_block * Opad
               + 6 * T * batch_block * H2) + 2 * weight_bytes
    vmem_limit = int(min(max(2 * est, 16 * 2**20), 64 * 2**20))

    out_tm = pl.pallas_call(
        functools.partial(fused_rnn_classifier_kernel, num_layers=num_layers),
        grid=(n_blocks,),
        in_specs=in_specs,
        out_specs=pl.BlockSpec((T, batch_block, Opad), lambda i: (0, i, 0)),
        out_shape=jax.ShapeDtypeStruct((T, Bp, Opad), jnp.float32),
        scratch_shapes=[pltpu.VMEM((T, batch_block, H2), jnp.float32),
                        pltpu.VMEM((T, batch_block, H2), jnp.float32)],
        compiler_params=pltpu.CompilerParams(
            dimension_semantics=("parallel",),
            vmem_limit_bytes=vmem_limit),
    )(*args)

    out = jnp.transpose(out_tm, (1, 0, 2))                       # (Bp, T, Opad)
    return out[:B, :, :output_size]


# ----------------------------------------------------------------------------
# Parameter init (xavier_normal weights, zero biases — mirrors init_weight)
# ----------------------------------------------------------------------------
def xavier_normal(key, fan_in, fan_out, shape):
    std = jnp.sqrt(2.0 / (fan_in + fan_out)).astype(jnp.float32)
    return std * jax.random.normal(key, shape, dtype=jnp.float32)


def make_params(key, input_size, hidden_size, output_size, num_layers):
    """Per-direction parameters (PyTorch weights pre-transposed)."""
    params = {}
    H = hidden_size
    for l in range(num_layers):
        din = input_size if l == 0 else 2 * H
        for tag in ("f", "b"):
            key, k1, k2 = jax.random.split(key, 3)
            params[f"w_ih_l{l}_{tag}"] = xavier_normal(k1, din, H, (din, H))
            params[f"w_hh_l{l}_{tag}"] = xavier_normal(k2, H, H, (H, H))
            params[f"b_l{l}_{tag}"] = jnp.zeros((1, H), jnp.float32)  # b_ih+b_hh
    key, k1 = jax.random.split(key)
    params["w_lin"] = xavier_normal(k1, 2 * H, output_size, (2 * H, output_size))
    params["b_lin"] = jnp.zeros((1, output_size), jnp.float32)
    return params


def fuse_params(params, num_layers, hidden_size, output_size, input_size,
                compute_dtype=jnp.bfloat16):
    """Pack + zero-pad per-direction weights into the vreg/MXU-aligned fused
    layout: Hp = round_up(H, 64) so 2*Hp is a multiple of 128 lanes;
    Opad = round_up(O, 128) so the output store is lane-dense.  Padded lanes
    are exactly zero, so the padded recurrence is bit-equivalent."""
    H = hidden_size
    Hp = _round_up(H, 64)
    H2 = 2 * Hp
    Opad = _round_up(output_size, 128)
    fused = {}
    for l in range(num_layers):
        wf, wb = params[f"w_ih_l{l}_f"], params[f"w_ih_l{l}_b"]
        if l == 0:
            w_ih = (jnp.zeros((input_size, H2), jnp.float32)
                    .at[:, :H].set(wf).at[:, Hp:Hp + H].set(wb))
        else:
            # input lanes laid out [fwd 0:H | pad | bwd Hp:Hp+H | pad]
            w_ih = (jnp.zeros((H2, H2), jnp.float32)
                    .at[:H, :H].set(wf[:H]).at[Hp:Hp + H, :H].set(wf[H:])
                    .at[:H, Hp:Hp + H].set(wb[:H])
                    .at[Hp:Hp + H, Hp:Hp + H].set(wb[H:]))
        w_hh = (jnp.zeros((H2, H2), jnp.float32)
                .at[:H, :H].set(params[f"w_hh_l{l}_f"])
                .at[Hp:Hp + H, Hp:Hp + H].set(params[f"w_hh_l{l}_b"]))
        b = (jnp.zeros((1, H2), jnp.float32)
             .at[:, :H].set(params[f"b_l{l}_f"])
             .at[:, Hp:Hp + H].set(params[f"b_l{l}_b"]))
        fused[f"w_ih_cat_l{l}"] = w_ih.astype(compute_dtype)
        fused[f"w_hh_blk_l{l}"] = w_hh.astype(compute_dtype)
        fused[f"b_cat_l{l}"] = b                     # bias stays f32
    w_lin = (jnp.zeros((H2, Opad), jnp.float32)
             .at[:H, :output_size].set(params["w_lin"][:H])
             .at[Hp:Hp + H, :output_size].set(params["w_lin"][H:]))
    b_lin = jnp.zeros((1, Opad), jnp.float32).at[:, :output_size].set(
        params["b_lin"][0])
    fused["w_lin"] = w_lin.astype(compute_dtype)
    fused["b_lin"] = b_lin
    return fused


# ----------------------------------------------------------------------------
# Pure-JAX reference (correctness check of the fused kernel)
# ----------------------------------------------------------------------------
def reference_forward(x, params, num_layers):
    h = x
    B, T, _ = x.shape
    for l in range(num_layers):
        outs = []
        for tag, reverse in (("f", False), ("b", True)):
            w_ih = params[f"w_ih_l{l}_{tag}"]
            w_hh = params[f"w_hh_l{l}_{tag}"]
            b = params[f"b_l{l}_{tag}"]
            H = w_hh.shape[1]
            hs = jnp.zeros((B, H), jnp.float32)
            ys = [None] * T
            order = range(T - 1, -1, -1) if reverse else range(T)
            for t in order:
                hs = jnp.tanh(h[:, t, :] @ w_ih + hs @ w_hh + b)
                ys[t] = hs
            outs.append(jnp.stack(ys, axis=1))
        h = jnp.concatenate(outs, axis=-1)
    return (h.reshape(B * T, -1) @ params["w_lin"] + params["b_lin"]).reshape(B, T, -1)


# ----------------------------------------------------------------------------
if __name__ == "__main__":
    INPUT_SIZE, HIDDEN_SIZE, OUTPUT_SIZE, NUM_LAYERS = 16, 32, 4, 2
    B, T = 2, 8

    key = jax.random.PRNGKey(0)
    key, kx = jax.random.split(key)
    x = jax.random.normal(kx, (B, T, INPUT_SIZE), dtype=jnp.float32)
    params = make_params(key, INPUT_SIZE, HIDDEN_SIZE, OUTPUT_SIZE, NUM_LAYERS)
    ref = reference_forward(x, params, NUM_LAYERS)

    # f32-weight run: strict check against the pure-JAX reference.
    fused_f32 = fuse_params(params, NUM_LAYERS, HIDDEN_SIZE, OUTPUT_SIZE,
                            INPUT_SIZE, compute_dtype=jnp.float32)
    out_f32 = jax.block_until_ready(
        rnn_classifier_forward(x, fused_f32, num_layers=NUM_LAYERS,
                               output_size=OUTPUT_SIZE))
    assert out_f32.shape == (B, T, OUTPUT_SIZE), out_f32.shape
    assert jnp.allclose(out_f32, ref, atol=1e-4, rtol=1e-4), \
        float(jnp.max(jnp.abs(out_f32 - ref)))

    # bf16-weight run (MXU-native path): compare against the reference using
    # the same bf16-rounded weights; f32 accumulation + f32 tanh keep the
    # remaining activation-cast error small.
    fused_bf16 = fuse_params(params, NUM_LAYERS, HIDDEN_SIZE, OUTPUT_SIZE,
                             INPUT_SIZE, compute_dtype=jnp.bfloat16)
    out_bf16 = jax.block_until_ready(
        rnn_classifier_forward(x, fused_bf16, num_layers=NUM_LAYERS,
                               output_size=OUTPUT_SIZE))
    params_q = {k: (v.astype(jnp.bfloat16).astype(jnp.float32)
                    if k.startswith("w") else v) for k, v in params.items()}
    ref_q = reference_forward(x, params_q, NUM_LAYERS)
    assert jnp.allclose(out_bf16, ref_q, atol=5e-2, rtol=5e-2), \
        float(jnp.max(jnp.abs(out_bf16 - ref_q)))

    print("KERNEL_OK")
</pallas_src>

<mosaic_0001>
module attributes {stable_mosaic.version = 11 : i64} {
  func.func @fused_rnn_classifier_kernel(%arg0: i32, %arg1: memref<8x8x16xf32, #tpu.memory_space<vmem>>, %arg2: memref<16x128xf32, #tpu.memory_space<vmem>>, %arg3: memref<128x128xf32, #tpu.memory_space<vmem>>, %arg4: memref<1x128xf32, #tpu.memory_space<vmem>>, %arg5: memref<128x128xf32, #tpu.memory_space<vmem>>, %arg6: memref<128x128xf32, #tpu.memory_space<vmem>>, %arg7: memref<1x128xf32, #tpu.memory_space<vmem>>, %arg8: memref<128x128xf32, #tpu.memory_space<vmem>>, %arg9: memref<1x128xf32, #tpu.memory_space<vmem>>, %arg10: memref<8x8x128xf32, #tpu.memory_space<vmem>>, %arg11: memref<8x8x128xf32, #tpu.memory_space<vmem>>, %arg12: memref<8x8x128xf32, #tpu.memory_space<vmem>>) attributes {dimension_semantics = [#tpu.dimension_semantics<parallel>], iteration_bounds = array<i64: 1>, scalar_prefetch = 0 : i64, scratch_operands = 2 : i64, tpu.core_type = #tpu.core_type<tc>, window_params = [{transform_indices = @transform_0, window_bounds = array<i64: 8, 8, 16>}, {pipeline_mode = #tpu.pipeline_mode<synchronous>, transform_indices = @transform_1, window_bounds = array<i64: 16, 128>}, {pipeline_mode = #tpu.pipeline_mode<synchronous>, transform_indices = @transform_2, window_bounds = array<i64: 128, 128>}, {pipeline_mode = #tpu.pipeline_mode<synchronous>, transform_indices = @transform_3, window_bounds = array<i64: 1, 128>}, {pipeline_mode = #tpu.pipeline_mode<synchronous>, transform_indices = @transform_4, window_bounds = array<i64: 128, 128>}, {pipeline_mode = #tpu.pipeline_mode<synchronous>, transform_indices = @transform_5, window_bounds = array<i64: 128, 128>}, {pipeline_mode = #tpu.pipeline_mode<synchronous>, transform_indices = @transform_6, window_bounds = array<i64: 1, 128>}, {pipeline_mode = #tpu.pipeline_mode<synchronous>, transform_indices = @transform_7, window_bounds = array<i64: 128, 128>}, {pipeline_mode = #tpu.pipeline_mode<synchronous>, transform_indices = @transform_8, window_bounds = array<i64: 1, 128>}, {transform_indices = @transform_9, window_bounds = array<i64: 8, 8, 128>}]} {
    %0 = tpu.iota {dimensions = array<i32: 1>} : vector<8x128xi32>
    %c64_i32 = arith.constant 64 : i32
    %1 = vector.broadcast %c64_i32 : i32 to vector<8x128xi32>
    %2 = arith.cmpi slt, %0, %1 : vector<8x128xi32>
    %cst = arith.constant dense<true> : vector<8x128xi1>
    %3 = arith.xori %2, %cst : vector<8x128xi1>
    %c0 = arith.constant 0 : index
    %c0_0 = arith.constant 0 : index
    %c0_1 = arith.constant 0 : index
    %4 = vector.load %arg1[%c0, %c0_0, %c0_1] : memref<8x8x16xf32, #tpu.memory_space<vmem>>, vector<8x8x16xf32>
    %5 = vector.shape_cast %4 : vector<8x8x16xf32> to vector<64x16xf32>
    %c0_2 = arith.constant 0 : index
    %c0_3 = arith.constant 0 : index
    %6 = vector.load %arg2[%c0_2, %c0_3] : memref<16x128xf32, #tpu.memory_space<vmem>>, vector<16x128xf32>
    %c0_4 = arith.constant 0 : index
    %c0_5 = arith.constant 0 : index
    %7 = vector.load %arg3[%c0_4, %c0_5] : memref<128x128xf32, #tpu.memory_space<vmem>>, vector<128x128xf32>
    %c0_6 = arith.constant 0 : index
    %c0_7 = arith.constant 0 : index
    %8 = vector.load %arg4[%c0_6, %c0_7] : memref<1x128xf32, #tpu.memory_space<vmem>>, vector<1x128xf32>
    %cst_8 = arith.constant dense<0.000000e+00> : vector<64x128xf32>
    %9 = tpu.matmul %5, %6, %cst_8 {dimension_numbers = #tpu.dot_dimension_numbers<[1], [0], [0], [1], [0, 0, 1, 1], [], []>} : vector<64x16xf32>, vector<16x128xf32>, vector<64x128xf32> -> vector<64x128xf32>
    %10 = vector.broadcast %8 : vector<1x128xf32> to vector<64x128xf32>
    %11 = arith.addf %9, %10 : vector<64x128xf32>
    %12 = vector.shape_cast %11 : vector<64x128xf32> to vector<8x8x128xf32>
    %c0_9 = arith.constant 0 : index
    %c0_10 = arith.constant 0 : index
    %c0_11 = arith.constant 0 : index
    %13 = vector.load %arg11[%c0_9, %c0_10, %c0_11] : memref<8x8x128xf32, #tpu.memory_space<vmem>>, vector<8x8x128xf32>
    tpu.vector_store %arg11[%c0_9, %c0_10, %c0_11], %12 {strides = array<i32>} : memref<8x8x128xf32, #tpu.memory_space<vmem>>, vector<8x8x128xf32>,
    %cst_12 = arith.constant 0.000000e+00 : f32
    %14 = vector.broadcast %cst_12 : f32 to vector<8x128xf32>
    %c0_i32 = arith.constant 0 : i32
    %15 = arith.index_cast %c0_i32 : i32 to index
    %c0_13 = arith.constant 0 : index
    %c0_14 = arith.constant 0 : index
    %16 = vector.load %arg11[%15, %c0_13, %c0_14] : memref<8x8x128xf32, #tpu.memory_space<vmem>>, vector<1x8x128xf32>
    %17 = vector.shape_cast %16 : vector<1x8x128xf32> to vector<8x128xf32>
    %c7_i32 = arith.constant 7 : i32
    %18 = arith.subi %c7_i32, %c0_i32 : i32
    %19 = arith.index_cast %18 : i32 to index
    %c0_15 = arith.constant 0 : index
    %c0_16 = arith.constant 0 : index
    %20 = vector.load %arg11[%19, %c0_15, %c0_16] : memref<8x8x128xf32, #tpu.memory_space<vmem>>, vector<1x8x128xf32>
    %21 = vector.shape_cast %20 : vector<1x8x128xf32> to vector<8x128xf32>
    %22 = arith.select %2, %17, %21 : vector<8x128xi1>, vector<8x128xf32>
    %cst_17 = arith.constant dense<0.000000e+00> : vector<8x128xf32>
    %23 = tpu.matmul %14, %7, %cst_17 {dimension_numbers = #tpu.dot_dimension_numbers<[1], [0], [0], [1], [0, 0, 1, 1], [], []>} : vector<8x128xf32>, vector<128x128xf32>, vector<8x128xf32> -> vector<8x128xf32>
    %24 = arith.addf %22, %23 : vector<8x128xf32>
    %25 = math.tanh %24 : vector<8x128xf32>
    %26 = arith.index_cast %c0_i32 : i32 to index
    %c0_18 = arith.constant 0 : index
    %c0_19 = arith.constant 0 : index
    %27 = vector.load %arg12[%26, %c0_18, %c0_19] : memref<8x8x128xf32, #tpu.memory_space<vmem>>, vector<1x8x128xf32>
    %28 = vector.shape_cast %27 : vector<1x8x128xf32> to vector<8x128xf32>
    %29 = vector.shape_cast %25 : vector<8x128xf32> to vector<1x8x128xf32>
    %30 = vector.shape_cast %2 : vector<8x128xi1> to vector<1x8x128xi1>
    tpu.vector_store %arg12[%26, %c0_18, %c0_19], %29 masked %30 {strides = array<i32>} : memref<8x8x128xf32, #tpu.memory_space<vmem>>, vector<1x8x128xf32>, vector<1x8x128xi1>
    %c7_i32_20 = arith.constant 7 : i32
    %31 = arith.subi %c7_i32_20, %c0_i32 : i32
    %32 = arith.index_cast %31 : i32 to index
    %c0_21 = arith.constant 0 : index
    %c0_22 = arith.constant 0 : index
    %33 = vector.load %arg12[%32, %c0_21, %c0_22] : memref<8x8x128xf32, #tpu.memory_space<vmem>>, vector<1x8x128xf32>
    %34 = vector.shape_cast %33 : vector<1x8x128xf32> to vector<8x128xf32>
    %35 = vector.shape_cast %25 : vector<8x128xf32> to vector<1x8x128xf32>
    %36 = vector.shape_cast %3 : vector<8x128xi1> to vector<1x8x128xi1>
    tpu.vector_store %arg12[%32, %c0_21, %c0_22], %35 masked %36 {strides = array<i32>} : memref<8x8x128xf32, #tpu.memory_space<vmem>>, vector<1x8x128xf32>, vector<1x8x128xi1>
    %c1_i32 = arith.constant 1 : i32
    %37 = arith.index_cast %c1_i32 : i32 to index
    %c0_23 = arith.constant 0 : index
    %c0_24 = arith.constant 0 : index
    %38 = vector.load %arg11[%37, %c0_23, %c0_24] : memref<8x8x128xf32, #tpu.memory_space<vmem>>, vector<1x8x128xf32>
    %39 = vector.shape_cast %38 : vector<1x8x128xf32> to vector<8x128xf32>
    %c7_i32_25 = arith.constant 7 : i32
    %40 = arith.subi %c7_i32_25, %c1_i32 : i32
    %41 = arith.index_cast %40 : i32 to index
    %c0_26 = arith.constant 0 : index
    %c0_27 = arith.constant 0 : index
    %42 = vector.load %arg11[%41, %c0_26, %c0_27] : memref<8x8x128xf32, #tpu.memory_space<vmem>>, vector<1x8x128xf32>
    %43 = vector.shape_cast %42 : vector<1x8x128xf32> to vector<8x128xf32>
    %44 = arith.select %2, %39, %43 : vector<8x128xi1>, vector<8x128xf32>
    %cst_28 = arith.constant dense<0.000000e+00> : vector<8x128xf32>
    %45 = tpu.matmul %25, %7, %cst_28 {dimension_numbers = #tpu.dot_dimension_numbers<[1], [0], [0], [1], [0, 0, 1, 1], [], []>} : vector<8x128xf32>, vector<128x128xf32>, vector<8x128xf32> -> vector<8x128xf32>
    %46 = arith.addf %44, %45 : vector<8x128xf32>
    %47 = math.tanh %46 : vector<8x128xf32>
    %48 = arith.index_cast %c1_i32 : i32 to index
    %c0_29 = arith.constant 0 : index
    %c0_30 = arith.constant 0 : index
    %49 = vector.load %arg12[%48, %c0_29, %c0_30] : memref<8x8x128xf32, #tpu.memory_space<vmem>>, vector<1x8x128xf32>
    %50 = vector.shape_cast %49 : vector<1x8x128xf32> to vector<8x128xf32>
    %51 = vector.shape_cast %47 : vector<8x128xf32> to vector<1x8x128xf32>
    %52 = vector.shape_cast %2 : vector<8x128xi1> to vector<1x8x128xi1>
    tpu.vector_store %arg12[%48, %c0_29, %c0_30], %51 masked %52 {strides = array<i32>} : memref<8x8x128xf32, #tpu.memory_space<vmem>>, vector<1x8x128xf32>, vector<1x8x128xi1>
    %c7_i32_31 = arith.constant 7 : i32
    %53 = arith.subi %c7_i32_31, %c1_i32 : i32
    %54 = arith.index_cast %53 : i32 to index
    %c0_32 = arith.constant 0 : index
    %c0_33 = arith.constant 0 : index
    %55 = vector.load %arg12[%54, %c0_32, %c0_33] : memref<8x8x128xf32, #tpu.memory_space<vmem>>, vector<1x8x128xf32>
    %56 = vector.shape_cast %55 : vector<1x8x128xf32> to vector<8x128xf32>
    %57 = vector.shape_cast %47 : vector<8x128xf32> to vector<1x8x128xf32>
    %58 = vector.shape_cast %3 : vector<8x128xi1> to vector<1x8x128xi1>
    tpu.vector_store %arg12[%54, %c0_32, %c0_33], %57 masked %58 {strides = array<i32>} : memref<8x8x128xf32, #tpu.memory_space<vmem>>, vector<1x8x128xf32>, vector<1x8x128xi1>
    %c2_i32 = arith.constant 2 : i32
    %59 = arith.index_cast %c2_i32 : i32 to index
    %c0_34 = arith.constant 0 : index
    %c0_35 = arith.constant 0 : index
    %60 = vector.load %arg11[%59, %c0_34, %c0_35] : memref<8x8x128xf32, #tpu.memory_space<vmem>>, vector<1x8x128xf32>
    %61 = vector.shape_cast %60 : vector<1x8x128xf32> to vector<8x128xf32>
    %c7_i32_36 = arith.constant 7 : i32
    %62 = arith.subi %c7_i32_36, %c2_i32 : i32
    %63 = arith.index_cast %62 : i32 to index
    %c0_37 = arith.constant 0 : index
    %c0_38 = arith.constant 0 : index
    %64 = vector.load %arg11[%63, %c0_37, %c0_38] : memref<8x8x128xf32, #tpu.memory_space<vmem>>, vector<1x8x128xf32>
    %65 = vector.shape_cast %64 : vector<1x8x128xf32> to vector<8x128xf32>
    %66 = arith.select %2, %61, %65 : vector<8x128xi1>, vector<8x128xf32>
    %cst_39 = arith.constant dense<0.000000e+00> : vector<8x128xf32>
    %67 = tpu.matmul %47, %7, %cst_39 {dimension_numbers = #tpu.dot_dimension_numbers<[1], [0], [0], [1], [0, 0, 1, 1], [], []>} : vector<8x128xf32>, vector<128x128xf32>, vector<8x128xf32> -> vector<8x128xf32>
    %68 = arith.addf %66, %67 : vector<8x128xf32>
    %69 = math.tanh %68 : vector<8x128xf32>
    %70 = arith.index_cast %c2_i32 : i32 to index
    %c0_40 = arith.constant 0 : index
    %c0_41 = arith.constant 0 : index
    %71 = vector.load %arg12[%70, %c0_40, %c0_41] : memref<8x8x128xf32, #tpu.memory_space<vmem>>, vector<1x8x128xf32>
    %72 = vector.shape_cast %71 : vector<1x8x128xf32> to vector<8x128xf32>
    %73 = vector.shape_cast %69 : vector<8x128xf32> to vector<1x8x128xf32>
    %74 = vector.shape_cast %2 : vector<8x128xi1> to vector<1x8x128xi1>
    tpu.vector_store %arg12[%70, %c0_40, %c0_41], %73 masked %74 {strides = array<i32>} : memref<8x8x128xf32, #tpu.memory_space<vmem>>, vector<1x8x128xf32>, vector<1x8x128xi1>
    %c7_i32_42 = arith.constant 7 : i32
    %75 = arith.subi %c7_i32_42, %c2_i32 : i32
    %76 = arith.index_cast %75 : i32 to index
    %c0_43 = arith.constant 0 : index
    %c0_44 = arith.constant 0 : index
    %77 = vector.load %arg12[%76, %c0_43, %c0_44] : memref<8x8x128xf32, #tpu.memory_space<vmem>>, vector<1x8x128xf32>
    %78 = vector.shape_cast %77 : vector<1x8x128xf32> to vector<8x128xf32>
    %79 = vector.shape_cast %69 : vector<8x128xf32> to vector<1x8x128xf32>
    %80 = vector.shape_cast %3 : vector<8x128xi1> to vector<1x8x128xi1>
    tpu.vector_store %arg12[%76, %c0_43, %c0_44], %79 masked %80 {strides = array<i32>} : memref<8x8x128xf32, #tpu.memory_space<vmem>>, vector<1x8x128xf32>, vector<1x8x128xi1>
    %c3_i32 = arith.constant 3 : i32
    %81 = arith.index_cast %c3_i32 : i32 to index
    %c0_45 = arith.constant 0 : index
    %c0_46 = arith.constant 0 : index
    %82 = vector.load %arg11[%81, %c0_45, %c0_46] : memref<8x8x128xf32, #tpu.memory_space<vmem>>, vector<1x8x128xf32>
    %83 = vector.shape_cast %82 : vector<1x8x128xf32> to vector<8x128xf32>
    %c7_i32_47 = arith.constant 7 : i32
    %84 = arith.subi %c7_i32_47, %c3_i32 : i32
    %85 = arith.index_cast %84 : i32 to index
    %c0_48 = arith.constant 0 : index
    %c0_49 = arith.constant 0 : index
    %86 = vector.load %arg11[%85, %c0_48, %c0_49] : memref<8x8x128xf32, #tpu.memory_space<vmem>>, vector<1x8x128xf32>
    %87 = vector.shape_cast %86 : vector<1x8x128xf32> to vector<8x128xf32>
    %88 = arith.select %2, %83, %87 : vector<8x128xi1>, vector<8x128xf32>
    %cst_50 = arith.constant dense<0.000000e+00> : vector<8x128xf32>
    %89 = tpu.matmul %69, %7, %cst_50 {dimension_numbers = #tpu.dot_dimension_numbers<[1], [0], [0], [1], [0, 0, 1, 1], [], []>} : vector<8x128xf32>, vector<128x128xf32>, vector<8x128xf32> -> vector<8x128xf32>
    %90 = arith.addf %88, %89 : vector<8x128xf32>
    %91 = math.tanh %90 : vector<8x128xf32>
    %92 = arith.index_cast %c3_i32 : i32 to index
    %c0_51 = arith.constant 0 : index
    %c0_52 = arith.constant 0 : index
    %93 = vector.load %arg12[%92, %c0_51, %c0_52] : memref<8x8x128xf32, #tpu.memory_space<vmem>>, vector<1x8x128xf32>
    %94 = vector.shape_cast %93 : vector<1x8x128xf32> to vector<8x128xf32>
    %95 = vector.shape_cast %91 : vector<8x128xf32> to vector<1x8x128xf32>
    %96 = vector.shape_cast %2 : vector<8x128xi1> to vector<1x8x128xi1>
    tpu.vector_store %arg12[%92, %c0_51, %c0_52], %95 masked %96 {strides = array<i32>} : memref<8x8x128xf32, #tpu.memory_space<vmem>>, vector<1x8x128xf32>, vector<1x8x128xi1>
    %c7_i32_53 = arith.constant 7 : i32
    %97 = arith.subi %c7_i32_53, %c3_i32 : i32
    %98 = arith.index_cast %97 : i32 to index
    %c0_54 = arith.constant 0 : index
    %c0_55 = arith.constant 0 : index
    %99 = vector.load %arg12[%98, %c0_54, %c0_55] : memref<8x8x128xf32, #tpu.memory_space<vmem>>, vector<1x8x128xf32>
    %100 = vector.shape_cast %99 : vector<1x8x128xf32> to vector<8x128xf32>
    %101 = vector.shape_cast %91 : vector<8x128xf32> to vector<1x8x128xf32>
    %102 = vector.shape_cast %3 : vector<8x128xi1> to vector<1x8x128xi1>
    tpu.vector_store %arg12[%98, %c0_54, %c0_55], %101 masked %102 {strides = array<i32>} : memref<8x8x128xf32, #tpu.memory_space<vmem>>, vector<1x8x128xf32>, vector<1x8x128xi1>
    %c4_i32 = arith.constant 4 : i32
    %103 = arith.index_cast %c4_i32 : i32 to index
    %c0_56 = arith.constant 0 : index
    %c0_57 = arith.constant 0 : index
    %104 = vector.load %arg11[%103, %c0_56, %c0_57] : memref<8x8x128xf32, #tpu.memory_space<vmem>>, vector<1x8x128xf32>
    %105 = vector.shape_cast %104 : vector<1x8x128xf32> to vector<8x128xf32>
    %c7_i32_58 = arith.constant 7 : i32
    %106 = arith.subi %c7_i32_58, %c4_i32 : i32
    %107 = arith.index_cast %106 : i32 to index
    %c0_59 = arith.constant 0 : index
    %c0_60 = arith.constant 0 : index
    %108 = vector.load %arg11[%107, %c0_59, %c0_60] : memref<8x8x128xf32, #tpu.memory_space<vmem>>, vector<1x8x128xf32>
    %109 = vector.shape_cast %108 : vector<1x8x128xf32> to vector<8x128xf32>
    %110 = arith.select %2, %105, %109 : vector<8x128xi1>, vector<8x128xf32>
    %cst_61 = arith.constant dense<0.000000e+00> : vector<8x128xf32>
    %111 = tpu.matmul %91, %7, %cst_61 {dimension_numbers = #tpu.dot_dimension_numbers<[1], [0], [0], [1], [0, 0, 1, 1], [], []>} : vector<8x128xf32>, vector<128x128xf32>, vector<8x128xf32> -> vector<8x128xf32>
    %112 = arith.addf %110, %111 : vector<8x128xf32>
    %113 = math.tanh %112 : vector<8x128xf32>
    %114 = arith.index_cast %c4_i32 : i32 to index
    %c0_62 = arith.constant 0 : index
    %c0_63 = arith.constant 0 : index
    %115 = vector.load %arg12[%114, %c0_62, %c0_63] : memref<8x8x128xf32, #tpu.memory_space<vmem>>, vector<1x8x128xf32>
    %116 = vector.shape_cast %115 : vector<1x8x128xf32> to vector<8x128xf32>
    %117 = vector.shape_cast %113 : vector<8x128xf32> to vector<1x8x128xf32>
    %118 = vector.shape_cast %2 : vector<8x128xi1> to vector<1x8x128xi1>
    tpu.vector_store %arg12[%114, %c0_62, %c0_63], %117 masked %118 {strides = array<i32>} : memref<8x8x128xf32, #tpu.memory_space<vmem>>, vector<1x8x128xf32>, vector<1x8x128xi1>
    %c7_i32_64 = arith.constant 7 : i32
    %119 = arith.subi %c7_i32_64, %c4_i32 : i32
    %120 = arith.index_cast %119 : i32 to index
    %c0_65 = arith.constant 0 : index
    %c0_66 = arith.constant 0 : index
    %121 = vector.load %arg12[%120, %c0_65, %c0_66] : memref<8x8x128xf32, #tpu.memory_space<vmem>>, vector<1x8x128xf32>
    %122 = vector.shape_cast %121 : vector<1x8x128xf32> to vector<8x128xf32>
    %123 = vector.shape_cast %113 : vector<8x128xf32> to vector<1x8x128xf32>
    %124 = vector.shape_cast %3 : vector<8x128xi1> to vector<1x8x128xi1>
    tpu.vector_store %arg12[%120, %c0_65, %c0_66], %123 masked %124 {strides = array<i32>} : memref<8x8x128xf32, #tpu.memory_space<vmem>>, vector<1x8x128xf32>, vector<1x8x128xi1>
    %c5_i32 = arith.constant 5 : i32
    %125 = arith.index_cast %c5_i32 : i32 to index
    %c0_67 = arith.constant 0 : index
    %c0_68 = arith.constant 0 : index
    %126 = vector.load %arg11[%125, %c0_67, %c0_68] : memref<8x8x128xf32, #tpu.memory_space<vmem>>, vector<1x8x128xf32>
    %127 = vector.shape_cast %126 : vector<1x8x128xf32> to vector<8x128xf32>
    %c7_i32_69 = arith.constant 7 : i32
    %128 = arith.subi %c7_i32_69, %c5_i32 : i32
    %129 = arith.index_cast %128 : i32 to index
    %c0_70 = arith.constant 0 : index
    %c0_71 = arith.constant 0 : index
    %130 = vector.load %arg11[%129, %c0_70, %c0_71] : memref<8x8x128xf32, #tpu.memory_space<vmem>>, vector<1x8x128xf32>
    %131 = vector.shape_cast %130 : vector<1x8x128xf32> to vector<8x128xf32>
    %132 = arith.select %2, %127, %131 : vector<8x128xi1>, vector<8x128xf32>
    %cst_72 = arith.constant dense<0.000000e+00> : vector<8x128xf32>
    %133 = tpu.matmul %113, %7, %cst_72 {dimension_numbers = #tpu.dot_dimension_numbers<[1], [0], [0], [1], [0, 0, 1, 1], [], []>} : vector<8x128xf32>, vector<128x128xf32>, vector<8x128xf32> -> vector<8x128xf32>
    %134 = arith.addf %132, %133 : vector<8x128xf32>
    %135 = math.tanh %134 : vector<8x128xf32>
    %136 = arith.index_cast %c5_i32 : i32 to index
    %c0_73 = arith.constant 0 : index
    %c0_74 = arith.constant 0 : index
    %137 = vector.load %arg12[%136, %c0_73, %c0_74] : memref<8x8x128xf32, #tpu.memory_space<vmem>>, vector<1x8x128xf32>
    %138 = vector.shape_cast %137 : vector<1x8x128xf32> to vector<8x128xf32>
    %139 = vector.shape_cast %135 : vector<8x128xf32> to vector<1x8x128xf32>
    %140 = vector.shape_cast %2 : vector<8x128xi1> to vector<1x8x128xi1>
    tpu.vector_store %arg12[%136, %c0_73, %c0_74], %139 masked %140 {strides = array<i32>} : memref<8x8x128xf32, #tpu.memory_space<vmem>>, vector<1x8x128xf32>, vector<1x8x128xi1>
    %c7_i32_75 = arith.constant 7 : i32
    %141 = arith.subi %c7_i32_75, %c5_i32 : i32
    %142 = arith.index_cast %141 : i32 to index
    %c0_76 = arith.constant 0 : index
    %c0_77 = arith.constant 0 : index
    %143 = vector.load %arg12[%142, %c0_76, %c0_77] : memref<8x8x128xf32, #tpu.memory_space<vmem>>, vector<1x8x128xf32>
    %144 = vector.shape_cast %143 : vector<1x8x128xf32> to vector<8x128xf32>
    %145 = vector.shape_cast %135 : vector<8x128xf32> to vector<1x8x128xf32>
    %146 = vector.shape_cast %3 : vector<8x128xi1> to vector<1x8x128xi1>
    tpu.vector_store %arg12[%142, %c0_76, %c0_77], %145 masked %146 {strides = array<i32>} : memref<8x8x128xf32, #tpu.memory_space<vmem>>, vector<1x8x128xf32>, vector<1x8x128xi1>
    %c6_i32 = arith.constant 6 : i32
    %147 = arith.index_cast %c6_i32 : i32 to index
    %c0_78 = arith.constant 0 : index
    %c0_79 = arith.constant 0 : index
    %148 = vector.load %arg11[%147, %c0_78, %c0_79] : memref<8x8x128xf32, #tpu.memory_space<vmem>>, vector<1x8x128xf32>
    %149 = vector.shape_cast %148 : vector<1x8x128xf32> to vector<8x128xf32>
    %c7_i32_80 = arith.constant 7 : i32
    %150 = arith.subi %c7_i32_80, %c6_i32 : i32
    %151 = arith.index_cast %150 : i32 to index
    %c0_81 = arith.constant 0 : index
    %c0_82 = arith.constant 0 : index
    %152 = vector.load %arg11[%151, %c0_81, %c0_82] : memref<8x8x128xf32, #tpu.memory_space<vmem>>, vector<1x8x128xf32>
    %153 = vector.shape_cast %152 : vector<1x8x128xf32> to vector<8x128xf32>
    %154 = arith.select %2, %149, %153 : vector<8x128xi1>, vector<8x128xf32>
    %cst_83 = arith.constant dense<0.000000e+00> : vector<8x128xf32>
    %155 = tpu.matmul %135, %7, %cst_83 {dimension_numbers = #tpu.dot_dimension_numbers<[1], [0], [0], [1], [0, 0, 1, 1], [], []>} : vector<8x128xf32>, vector<128x128xf32>, vector<8x128xf32> -> vector<8x128xf32>
    %156 = arith.addf %154, %155 : vector<8x128xf32>
    %157 = math.tanh %156 : vector<8x128xf32>
    %158 = arith.index_cast %c6_i32 : i32 to index
    %c0_84 = arith.constant 0 : index
    %c0_85 = arith.constant 0 : index
    %159 = vector.load %arg12[%158, %c0_84, %c0_85] : memref<8x8x128xf32, #tpu.memory_space<vmem>>, vector<1x8x128xf32>
    %160 = vector.shape_cast %159 : vector<1x8x128xf32> to vector<8x128xf32>
    %161 = vector.shape_cast %157 : vector<8x128xf32> to vector<1x8x128xf32>
    %162 = vector.shape_cast %2 : vector<8x128xi1> to vector<1x8x128xi1>
    tpu.vector_store %arg12[%158, %c0_84, %c0_85], %161 masked %162 {strides = array<i32>} : memref<8x8x128xf32, #tpu.memory_space<vmem>>, vector<1x8x128xf32>, vector<1x8x128xi1>
    %c7_i32_86 = arith.constant 7 : i32
    %163 = arith.subi %c7_i32_86, %c6_i32 : i32
    %164 = arith.index_cast %163 : i32 to index
    %c0_87 = arith.constant 0 : index
    %c0_88 = arith.constant 0 : index
    %165 = vector.load %arg12[%164, %c0_87, %c0_88] : memref<8x8x128xf32, #tpu.memory_space<vmem>>, vector<1x8x128xf32>
    %166 = vector.shape_cast %165 : vector<1x8x128xf32> to vector<8x128xf32>
    %167 = vector.shape_cast %157 : vector<8x128xf32> to vector<1x8x128xf32>
    %168 = vector.shape_cast %3 : vector<8x128xi1> to vector<1x8x128xi1>
    tpu.vector_store %arg12[%164, %c0_87, %c0_88], %167 masked %168 {strides = array<i32>} : memref<8x8x128xf32, #tpu.memory_space<vmem>>, vector<1x8x128xf32>, vector<1x8x128xi1>
    %c7_i32_89 = arith.constant 7 : i32
    %169 = arith.index_cast %c7_i32_89 : i32 to index
    %c0_90 = arith.constant 0 : index
    %c0_91 = arith.constant 0 : index
    %170 = vector.load %arg11[%169, %c0_90, %c0_91] : memref<8x8x128xf32, #tpu.memory_space<vmem>>, vector<1x8x128xf32>
    %171 = vector.shape_cast %170 : vector<1x8x128xf32> to vector<8x128xf32>
    %c7_i32_92 = arith.constant 7 : i32
    %172 = arith.subi %c7_i32_92, %c7_i32_89 : i32
    %173 = arith.index_cast %172 : i32 to index
    %c0_93 = arith.constant 0 : index
    %c0_94 = arith.constant 0 : index
    %174 = vector.load %arg11[%173, %c0_93, %c0_94] : memref<8x8x128xf32, #tpu.memory_space<vmem>>, vector<1x8x128xf32>
    %175 = vector.shape_cast %174 : vector<1x8x128xf32> to vector<8x128xf32>
    %176 = arith.select %2, %171, %175 : vector<8x128xi1>, vector<8x128xf32>
    %cst_95 = arith.constant dense<0.000000e+00> : vector<8x128xf32>
    %177 = tpu.matmul %157, %7, %cst_95 {dimension_numbers = #tpu.dot_dimension_numbers<[1], [0], [0], [1], [0, 0, 1, 1], [], []>} : vector<8x128xf32>, vector<128x128xf32>, vector<8x128xf32> -> vector<8x128xf32>
    %178 = arith.addf %176, %177 : vector<8x128xf32>
    %179 = math.tanh %178 : vector<8x128xf32>
    %180 = arith.index_cast %c7_i32_89 : i32 to index
    %c0_96 = arith.constant 0 : index
    %c0_97 = arith.constant 0 : index
    %181 = vector.load %arg12[%180, %c0_96, %c0_97] : memref<8x8x128xf32, #tpu.memory_space<vmem>>, vector<1x8x128xf32>
    %182 = vector.shape_cast %181 : vector<1x8x128xf32> to vector<8x128xf32>
    %183 = vector.shape_cast %179 : vector<8x128xf32> to vector<1x8x128xf32>
    %184 = vector.shape_cast %2 : vector<8x128xi1> to vector<1x8x128xi1>
    tpu.vector_store %arg12[%180, %c0_96, %c0_97], %183 masked %184 {strides = array<i32>} : memref<8x8x128xf32, #tpu.memory_space<vmem>>, vector<1x8x128xf32>, vector<1x8x128xi1>
    %c7_i32_98 = arith.constant 7 : i32
    %185 = arith.subi %c7_i32_98, %c7_i32_89 : i32
    %186 = arith.index_cast %185 : i32 to index
    %c0_99 = arith.constant 0 : index
    %c0_100 = arith.constant 0 : index
    %187 = vector.load %arg12[%186, %c0_99, %c0_100] : memref<8x8x128xf32, #tpu.memory_space<vmem>>, vector<1x8x128xf32>
    %188 = vector.shape_cast %187 : vector<1x8x128xf32> to vector<8x128xf32>
    %189 = vector.shape_cast %179 : vector<8x128xf32> to vector<1x8x128xf32>
    %190 = vector.shape_cast %3 : vector<8x128xi1> to vector<1x8x128xi1>
    tpu.vector_store %arg12[%186, %c0_99, %c0_100], %189 masked %190 {strides = array<i32>} : memref<8x8x128xf32, #tpu.memory_space<vmem>>, vector<1x8x128xf32>, vector<1x8x128xi1>
    %c8_i32 = arith.constant 8 : i32
    %c0_101 = arith.constant 0 : index
    %c0_102 = arith.constant 0 : index
    %c0_103 = arith.constant 0 : index
    %191 = vector.load %arg12[%c0_101, %c0_102, %c0_103] : memref<8x8x128xf32, #tpu.memory_space<vmem>>, vector<8x8x128xf32>
    %192 = vector.shape_cast %191 : vector<8x8x128xf32> to vector<64x128xf32>
    %c0_104 = arith.constant 0 : index
    %c0_105 = arith.constant 0 : index
    %193 = vector.load %arg5[%c0_104, %c0_105] : memref<128x128xf32, #tpu.memory_space<vmem>>, vector<128x128xf32>
    %c0_106 = arith.constant 0 : index
    %c0_107 = arith.constant 0 : index
    %194 = vector.load %arg6[%c0_106, %c0_107] : memref<128x128xf32, #tpu.memory_space<vmem>>, vector<128x128xf32>
    %c0_108 = arith.constant 0 : index
    %c0_109 = arith.constant 0 : index
    %195 = vector.load %arg7[%c0_108, %c0_109] : memref<1x128xf32, #tpu.memory_space<vmem>>, vector<1x128xf32>
    %cst_110 = arith.constant dense<0.000000e+00> : vector<64x128xf32>
    %196 = tpu.matmul %192, %193, %cst_110 {dimension_numbers = #tpu.dot_dimension_numbers<[1], [0], [0], [1], [0, 0, 1, 1], [], []>} : vector<64x128xf32>, vector<128x128xf32>, vector<64x128xf32> -> vector<64x128xf32>
    %197 = vector.broadcast %195 : vector<1x128xf32> to vector<64x128xf32>
    %198 = arith.addf %196, %197 : vector<64x128xf32>
    %199 = vector.shape_cast %198 : vector<64x128xf32> to vector<8x8x128xf32>
    %c0_111 = arith.constant 0 : index
    %c0_112 = arith.constant 0 : index
    %c0_113 = arith.constant 0 : index
    %200 = vector.load %arg11[%c0_111, %c0_112, %c0_113] : memref<8x8x128xf32, #tpu.memory_space<vmem>>, vector<8x8x128xf32>
    tpu.vector_store %arg11[%c0_111, %c0_112, %c0_113], %199 {strides = array<i32>} : memref<8x8x128xf32, #tpu.memory_space<vmem>>, vector<8x8x128xf32>,
    %cst_114 = arith.constant 0.000000e+00 : f32
    %201 = vector.broadcast %cst_114 : f32 to vector<8x128xf32>
    %c0_i32_115 = arith.constant 0 : i32
    %202 = arith.index_cast %c0_i32_115 : i32 to index
    %c0_116 = arith.constant 0 : index
    %c0_117 = arith.constant 0 : index
    %203 = vector.load %arg11[%202, %c0_116, %c0_117] : memref<8x8x128xf32, #tpu.memory_space<vmem>>, vector<1x8x128xf32>
    %204 = vector.shape_cast %203 : vector<1x8x128xf32> to vector<8x128xf32>
    %c7_i32_118 = arith.constant 7 : i32
    %205 = arith.subi %c7_i32_118, %c0_i32_115 : i32
    %206 = arith.index_cast %205 : i32 to index
    %c0_119 = arith.constant 0 : index
    %c0_120 = arith.constant 0 : index
    %207 = vector.load %arg11[%206, %c0_119, %c0_120] : memref<8x8x128xf32, #tpu.memory_space<vmem>>, vector<1x8x128xf32>
    %208 = vector.shape_cast %207 : vector<1x8x128xf32> to vector<8x128xf32>
    %209 = arith.select %2, %204, %208 : vector<8x128xi1>, vector<8x128xf32>
    %cst_121 = arith.constant dense<0.000000e+00> : vector<8x128xf32>
    %210 = tpu.matmul %201, %194, %cst_121 {dimension_numbers = #tpu.dot_dimension_numbers<[1], [0], [0], [1], [0, 0, 1, 1], [], []>} : vector<8x128xf32>, vector<128x128xf32>, vector<8x128xf32> -> vector<8x128xf32>
    %211 = arith.addf %209, %210 : vector<8x128xf32>
    %212 = math.tanh %211 : vector<8x128xf32>
    %213 = arith.index_cast %c0_i32_115 : i32 to index
    %c0_122 = arith.constant 0 : index
    %c0_123 = arith.constant 0 : index
    %214 = vector.load %arg12[%213, %c0_122, %c0_123] : memref<8x8x128xf32, #tpu.memory_space<vmem>>, vector<1x8x128xf32>
    %215 = vector.shape_cast %214 : vector<1x8x128xf32> to vector<8x128xf32>
    %216 = vector.shape_cast %212 : vector<8x128xf32> to vector<1x8x128xf32>
    %217 = vector.shape_cast %2 : vector<8x128xi1> to vector<1x8x128xi1>
    tpu.vector_store %arg12[%213, %c0_122, %c0_123], %216 masked %217 {strides = array<i32>} : memref<8x8x128xf32, #tpu.memory_space<vmem>>, vector<1x8x128xf32>, vector<1x8x128xi1>
    %c7_i32_124 = arith.constant 7 : i32
    %218 = arith.subi %c7_i32_124, %c0_i32_115 : i32
    %219 = arith.index_cast %218 : i32 to index
    %c0_125 = arith.constant 0 : index
    %c0_126 = arith.constant 0 : index
    %220 = vector.load %arg12[%219, %c0_125, %c0_126] : memref<8x8x128xf32, #tpu.memory_space<vmem>>, vector<1x8x128xf32>
    %221 = vector.shape_cast %220 : vector<1x8x128xf32> to vector<8x128xf32>
    %222 = vector.shape_cast %212 : vector<8x128xf32> to vector<1x8x128xf32>
    %223 = vector.shape_cast %3 : vector<8x128xi1> to vector<1x8x128xi1>
    tpu.vector_store %arg12[%219, %c0_125, %c0_126], %222 masked %223 {strides = array<i32>} : memref<8x8x128xf32, #tpu.memory_space<vmem>>, vector<1x8x128xf32>, vector<1x8x128xi1>
    %c1_i32_127 = arith.constant 1 : i32
    %224 = arith.index_cast %c1_i32_127 : i32 to index
    %c0_128 = arith.constant 0 : index
    %c0_129 = arith.constant 0 : index
    %225 = vector.load %arg11[%224, %c0_128, %c0_129] : memref<8x8x128xf32, #tpu.memory_space<vmem>>, vector<1x8x128xf32>
    %226 = vector.shape_cast %225 : vector<1x8x128xf32> to vector<8x128xf32>
    %c7_i32_130 = arith.constant 7 : i32
    %227 = arith.subi %c7_i32_130, %c1_i32_127 : i32
    %228 = arith.index_cast %227 : i32 to index
    %c0_131 = arith.constant 0 : index
    %c0_132 = arith.constant 0 : index
    %229 = vector.load %arg11[%228, %c0_131, %c0_132] : memref<8x8x128xf32, #tpu.memory_space<vmem>>, vector<1x8x128xf32>
    %230 = vector.shape_cast %229 : vector<1x8x128xf32> to vector<8x128xf32>
    %231 = arith.select %2, %226, %230 : vector<8x128xi1>, vector<8x128xf32>
    %cst_133 = arith.constant dense<0.000000e+00> : vector<8x128xf32>
    %232 = tpu.matmul %212, %194, %cst_133 {dimension_numbers = #tpu.dot_dimension_numbers<[1], [0], [0], [1], [0, 0, 1, 1], [], []>} : vector<8x128xf32>, vector<128x128xf32>, vector<8x128xf32> -> vector<8x128xf32>
    %233 = arith.addf %231, %232 : vector<8x128xf32>
    %234 = math.tanh %233 : vector<8x128xf32>
    %235 = arith.index_cast %c1_i32_127 : i32 to index
    %c0_134 = arith.constant 0 : index
    %c0_135 = arith.constant 0 : index
    %236 = vector.load %arg12[%235, %c0_134, %c0_135] : memref<8x8x128xf32, #tpu.memory_space<vmem>>, vector<1x8x128xf32>
    %237 = vector.shape_cast %236 : vector<1x8x128xf32> to vector<8x128xf32>
    %238 = vector.shape_cast %234 : vector<8x128xf32> to vector<1x8x128xf32>
    %239 = vector.shape_cast %2 : vector<8x128xi1> to vector<1x8x128xi1>
    tpu.vector_store %arg12[%235, %c0_134, %c0_135], %238 masked %239 {strides = array<i32>} : memref<8x8x128xf32, #tpu.memory_space<vmem>>, vector<1x8x128xf32>, vector<1x8x128xi1>
    %c7_i32_136 = arith.constant 7 : i32
    %240 = arith.subi %c7_i32_136, %c1_i32_127 : i32
    %241 = arith.index_cast %240 : i32 to index
    %c0_137 = arith.constant 0 : index
    %c0_138 = arith.constant 0 : index
    %242 = vector.load %arg12[%241, %c0_137, %c0_138] : memref<8x8x128xf32, #tpu.memory_space<vmem>>, vector<1x8x128xf32>
    %243 = vector.shape_cast %242 : vector<1x8x128xf32> to vector<8x128xf32>
    %244 = vector.shape_cast %234 : vector<8x128xf32> to vector<1x8x128xf32>
    %245 = vector.shape_cast %3 : vector<8x128xi1> to vector<1x8x128xi1>
    tpu.vector_store %arg12[%241, %c0_137, %c0_138], %244 masked %245 {strides = array<i32>} : memref<8x8x128xf32, #tpu.memory_space<vmem>>, vector<1x8x128xf32>, vector<1x8x128xi1>
    %c2_i32_139 = arith.constant 2 : i32
    %246 = arith.index_cast %c2_i32_139 : i32 to index
    %c0_140 = arith.constant 0 : index
    %c0_141 = arith.constant 0 : index
    %247 = vector.load %arg11[%246, %c0_140, %c0_141] : memref<8x8x128xf32, #tpu.memory_space<vmem>>, vector<1x8x128xf32>
    %248 = vector.shape_cast %247 : vector<1x8x128xf32> to vector<8x128xf32>
    %c7_i32_142 = arith.constant 7 : i32
    %249 = arith.subi %c7_i32_142, %c2_i32_139 : i32
    %250 = arith.index_cast %249 : i32 to index
    %c0_143 = arith.constant 0 : index
    %c0_144 = arith.constant 0 : index
    %251 = vector.load %arg11[%250, %c0_143, %c0_144] : memref<8x8x128xf32, #tpu.memory_space<vmem>>, vector<1x8x128xf32>
    %252 = vector.shape_cast %251 : vector<1x8x128xf32> to vector<8x128xf32>
    %253 = arith.select %2, %248, %252 : vector<8x128xi1>, vector<8x128xf32>
    %cst_145 = arith.constant dense<0.000000e+00> : vector<8x128xf32>
    %254 = tpu.matmul %234, %194, %cst_145 {dimension_numbers = #tpu.dot_dimension_numbers<[1], [0], [0], [1], [0, 0, 1, 1], [], []>} : vector<8x128xf32>, vector<128x128xf32>, vector<8x128xf32> -> vector<8x128xf32>
    %255 = arith.addf %253, %254 : vector<8x128xf32>
    %256 = math.tanh %255 : vector<8x128xf32>
    %257 = arith.index_cast %c2_i32_139 : i32 to index
    %c0_146 = arith.constant 0 : index
    %c0_147 = arith.constant 0 : index
    %258 = vector.load %arg12[%257, %c0_146, %c0_147] : memref<8x8x128xf32, #tpu.memory_space<vmem>>, vector<1x8x128xf32>
    %259 = vector.shape_cast %258 : vector<1x8x128xf32> to vector<8x128xf32>
    %260 = vector.shape_cast %256 : vector<8x128xf32> to vector<1x8x128xf32>
    %261 = vector.shape_cast %2 : vector<8x128xi1> to vector<1x8x128xi1>
    tpu.vector_store %arg12[%257, %c0_146, %c0_147], %260 masked %261 {strides = array<i32>} : memref<8x8x128xf32, #tpu.memory_space<vmem>>, vector<1x8x128xf32>, vector<1x8x128xi1>
    %c7_i32_148 = arith.constant 7 : i32
    %262 = arith.subi %c7_i32_148, %c2_i32_139 : i32
    %263 = arith.index_cast %262 : i32 to index
    %c0_149 = arith.constant 0 : index
    %c0_150 = arith.constant 0 : index
    %264 = vector.load %arg12[%263, %c0_149, %c0_150] : memref<8x8x128xf32, #tpu.memory_space<vmem>>, vector<1x8x128xf32>
    %265 = vector.shape_cast %264 : vector<1x8x128xf32> to vector<8x128xf32>
    %266 = vector.shape_cast %256 : vector<8x128xf32> to vector<1x8x128xf32>
    %267 = vector.shape_cast %3 : vector<8x128xi1> to vector<1x8x128xi1>
    tpu.vector_store %arg12[%263, %c0_149, %c0_150], %266 masked %267 {strides = array<i32>} : memref<8x8x128xf32, #tpu.memory_space<vmem>>, vector<1x8x128xf32>, vector<1x8x128xi1>
    %c3_i32_151 = arith.constant 3 : i32
    %268 = arith.index_cast %c3_i32_151 : i32 to index
    %c0_152 = arith.constant 0 : index
    %c0_153 = arith.constant 0 : index
    %269 = vector.load %arg11[%268, %c0_152, %c0_153] : memref<8x8x128xf32, #tpu.memory_space<vmem>>, vector<1x8x128xf32>
    %270 = vector.shape_cast %269 : vector<1x8x128xf32> to vector<8x128xf32>
    %c7_i32_154 = arith.constant 7 : i32
    %271 = arith.subi %c7_i32_154, %c3_i32_151 : i32
    %272 = arith.index_cast %271 : i32 to index
    %c0_155 = arith.constant 0 : index
    %c0_156 = arith.constant 0 : index
    %273 = vector.load %arg11[%272, %c0_155, %c0_156] : memref<8x8x128xf32, #tpu.memory_space<vmem>>, vector<1x8x128xf32>
    %274 = vector.shape_cast %273 : vector<1x8x128xf32> to vector<8x128xf32>
    %275 = arith.select %2, %270, %274 : vector<8x128xi1>, vector<8x128xf32>
    %cst_157 = arith.constant dense<0.000000e+00> : vector<8x128xf32>
    %276 = tpu.matmul %256, %194, %cst_157 {dimension_numbers = #tpu.dot_dimension_numbers<[1], [0], [0], [1], [0, 0, 1, 1], [], []>} : vector<8x128xf32>, vector<128x128xf32>, vector<8x128xf32> -> vector<8x128xf32>
    %277 = arith.addf %275, %276 : vector<8x128xf32>
    %278 = math.tanh %277 : vector<8x128xf32>
    %279 = arith.index_cast %c3_i32_151 : i32 to index
    %c0_158 = arith.constant 0 : index
    %c0_159 = arith.constant 0 : index
    %280 = vector.load %arg12[%279, %c0_158, %c0_159] : memref<8x8x128xf32, #tpu.memory_space<vmem>>, vector<1x8x128xf32>
    %281 = vector.shape_cast %280 : vector<1x8x128xf32> to vector<8x128xf32>
    %282 = vector.shape_cast %278 : vector<8x128xf32> to vector<1x8x128xf32>
    %283 = vector.shape_cast %2 : vector<8x128xi1> to vector<1x8x128xi1>
    tpu.vector_store %arg12[%279, %c0_158, %c0_159], %282 masked %283 {strides = array<i32>} : memref<8x8x128xf32, #tpu.memory_space<vmem>>, vector<1x8x128xf32>, vector<1x8x128xi1>
    %c7_i32_160 = arith.constant 7 : i32
    %284 = arith.subi %c7_i32_160, %c3_i32_151 : i32
    %285 = arith.index_cast %284 : i32 to index
    %c0_161 = arith.constant 0 : index
    %c0_162 = arith.constant 0 : index
    %286 = vector.load %arg12[%285, %c0_161, %c0_162] : memref<8x8x128xf32, #tpu.memory_space<vmem>>, vector<1x8x128xf32>
    %287 = vector.shape_cast %286 : vector<1x8x128xf32> to vector<8x128xf32>
    %288 = vector.shape_cast %278 : vector<8x128xf32> to vector<1x8x128xf32>
    %289 = vector.shape_cast %3 : vector<8x128xi1> to vector<1x8x128xi1>
    tpu.vector_store %arg12[%285, %c0_161, %c0_162], %288 masked %289 {strides = array<i32>} : memref<8x8x128xf32, #tpu.memory_space<vmem>>, vector<1x8x128xf32>, vector<1x8x128xi1>
    %c4_i32_163 = arith.constant 4 : i32
    %290 = arith.index_cast %c4_i32_163 : i32 to index
    %c0_164 = arith.constant 0 : index
    %c0_165 = arith.constant 0 : index
    %291 = vector.load %arg11[%290, %c0_164, %c0_165] : memref<8x8x128xf32, #tpu.memory_space<vmem>>, vector<1x8x128xf32>
    %292 = vector.shape_cast %291 : vector<1x8x128xf32> to vector<8x128xf32>
    %c7_i32_166 = arith.constant 7 : i32
    %293 = arith.subi %c7_i32_166, %c4_i32_163 : i32
    %294 = arith.index_cast %293 : i32 to index
    %c0_167 = arith.constant 0 : index
    %c0_168 = arith.constant 0 : index
    %295 = vector.load %arg11[%294, %c0_167, %c0_168] : memref<8x8x128xf32, #tpu.memory_space<vmem>>, vector<1x8x128xf32>
    %296 = vector.shape_cast %295 : vector<1x8x128xf32> to vector<8x128xf32>
    %297 = arith.select %2, %292, %296 : vector<8x128xi1>, vector<8x128xf32>
    %cst_169 = arith.constant dense<0.000000e+00> : vector<8x128xf32>
    %298 = tpu.matmul %278, %194, %cst_169 {dimension_numbers = #tpu.dot_dimension_numbers<[1], [0], [0], [1], [0, 0, 1, 1], [], []>} : vector<8x128xf32>, vector<128x128xf32>, vector<8x128xf32> -> vector<8x128xf32>
    %299 = arith.addf %297, %298 : vector<8x128xf32>
    %300 = math.tanh %299 : vector<8x128xf32>
    %301 = arith.index_cast %c4_i32_163 : i32 to index
    %c0_170 = arith.constant 0 : index
    %c0_171 = arith.constant 0 : index
    %302 = vector.load %arg12[%301, %c0_170, %c0_171] : memref<8x8x128xf32, #tpu.memory_space<vmem>>, vector<1x8x128xf32>
    %303 = vector.shape_cast %302 : vector<1x8x128xf32> to vector<8x128xf32>
    %304 = vector.shape_cast %300 : vector<8x128xf32> to vector<1x8x128xf32>
    %305 = vector.shape_cast %2 : vector<8x128xi1> to vector<1x8x128xi1>
    tpu.vector_store %arg12[%301, %c0_170, %c0_171], %304 masked %305 {strides = array<i32>} : memref<8x8x128xf32, #tpu.memory_space<vmem>>, vector<1x8x128xf32>, vector<1x8x128xi1>
    %c7_i32_172 = arith.constant 7 : i32
    %306 = arith.subi %c7_i32_172, %c4_i32_163 : i32
    %307 = arith.index_cast %306 : i32 to index
    %c0_173 = arith.constant 0 : index
    %c0_174 = arith.constant 0 : index
    %308 = vector.load %arg12[%307, %c0_173, %c0_174] : memref<8x8x128xf32, #tpu.memory_space<vmem>>, vector<1x8x128xf32>
    %309 = vector.shape_cast %308 : vector<1x8x128xf32> to vector<8x128xf32>
    %310 = vector.shape_cast %300 : vector<8x128xf32> to vector<1x8x128xf32>
    %311 = vector.shape_cast %3 : vector<8x128xi1> to vector<1x8x128xi1>
    tpu.vector_store %arg12[%307, %c0_173, %c0_174], %310 masked %311 {strides = array<i32>} : memref<8x8x128xf32, #tpu.memory_space<vmem>>, vector<1x8x128xf32>, vector<1x8x128xi1>
    %c5_i32_175 = arith.constant 5 : i32
    %312 = arith.index_cast %c5_i32_175 : i32 to index
    %c0_176 = arith.constant 0 : index
    %c0_177 = arith.constant 0 : index
    %313 = vector.load %arg11[%312, %c0_176, %c0_177] : memref<8x8x128xf32, #tpu.memory_space<vmem>>, vector<1x8x128xf32>
    %314 = vector.shape_cast %313 : vector<1x8x128xf32> to vector<8x128xf32>
    %c7_i32_178 = arith.constant 7 : i32
    %315 = arith.subi %c7_i32_178, %c5_i32_175 : i32
    %316 = arith.index_cast %315 : i32 to index
    %c0_179 = arith.constant 0 : index
    %c0_180 = arith.constant 0 : index
    %317 = vector.load %arg11[%316, %c0_179, %c0_180] : memref<8x8x128xf32, #tpu.memory_space<vmem>>, vector<1x8x128xf32>
    %318 = vector.shape_cast %317 : vector<1x8x128xf32> to vector<8x128xf32>
    %319 = arith.select %2, %314, %318 : vector<8x128xi1>, vector<8x128xf32>
    %cst_181 = arith.constant dense<0.000000e+00> : vector<8x128xf32>
    %320 = tpu.matmul %300, %194, %cst_181 {dimension_numbers = #tpu.dot_dimension_numbers<[1], [0], [0], [1], [0, 0, 1, 1], [], []>} : vector<8x128xf32>, vector<128x128xf32>, vector<8x128xf32> -> vector<8x128xf32>
    %321 = arith.addf %319, %320 : vector<8x128xf32>
    %322 = math.tanh %321 : vector<8x128xf32>
    %323 = arith.index_cast %c5_i32_175 : i32 to index
    %c0_182 = arith.constant 0 : index
    %c0_183 = arith.constant 0 : index
    %324 = vector.load %arg12[%323, %c0_182, %c0_183] : memref<8x8x128xf32, #tpu.memory_space<vmem>>, vector<1x8x128xf32>
    %325 = vector.shape_cast %324 : vector<1x8x128xf32> to vector<8x128xf32>
    %326 = vector.shape_cast %322 : vector<8x128xf32> to vector<1x8x128xf32>
    %327 = vector.shape_cast %2 : vector<8x128xi1> to vector<1x8x128xi1>
    tpu.vector_store %arg12[%323, %c0_182, %c0_183], %326 masked %327 {strides = array<i32>} : memref<8x8x128xf32, #tpu.memory_space<vmem>>, vector<1x8x128xf32>, vector<1x8x128xi1>
    %c7_i32_184 = arith.constant 7 : i32
    %328 = arith.subi %c7_i32_184, %c5_i32_175 : i32
    %329 = arith.index_cast %328 : i32 to index
    %c0_185 = arith.constant 0 : index
    %c0_186 = arith.constant 0 : index
    %330 = vector.load %arg12[%329, %c0_185, %c0_186] : memref<8x8x128xf32, #tpu.memory_space<vmem>>, vector<1x8x128xf32>
    %331 = vector.shape_cast %330 : vector<1x8x128xf32> to vector<8x128xf32>
    %332 = vector.shape_cast %322 : vector<8x128xf32> to vector<1x8x128xf32>
    %333 = vector.shape_cast %3 : vector<8x128xi1> to vector<1x8x128xi1>
    tpu.vector_store %arg12[%329, %c0_185, %c0_186], %332 masked %333 {strides = array<i32>} : memref<8x8x128xf32, #tpu.memory_space<vmem>>, vector<1x8x128xf32>, vector<1x8x128xi1>
    %c6_i32_187 = arith.constant 6 : i32
    %334 = arith.index_cast %c6_i32_187 : i32 to index
    %c0_188 = arith.constant 0 : index
    %c0_189 = arith.constant 0 : index
    %335 = vector.load %arg11[%334, %c0_188, %c0_189] : memref<8x8x128xf32, #tpu.memory_space<vmem>>, vector<1x8x128xf32>
    %336 = vector.shape_cast %335 : vector<1x8x128xf32> to vector<8x128xf32>
    %c7_i32_190 = arith.constant 7 : i32
    %337 = arith.subi %c7_i32_190, %c6_i32_187 : i32
    %338 = arith.index_cast %337 : i32 to index
    %c0_191 = arith.constant 0 : index
    %c0_192 = arith.constant 0 : index
    %339 = vector.load %arg11[%338, %c0_191, %c0_192] : memref<8x8x128xf32, #tpu.memory_space<vmem>>, vector<1x8x128xf32>
    %340 = vector.shape_cast %339 : vector<1x8x128xf32> to vector<8x128xf32>
    %341 = arith.select %2, %336, %340 : vector<8x128xi1>, vector<8x128xf32>
    %cst_193 = arith.constant dense<0.000000e+00> : vector<8x128xf32>
    %342 = tpu.matmul %322, %194, %cst_193 {dimension_numbers = #tpu.dot_dimension_numbers<[1], [0], [0], [1], [0, 0, 1, 1], [], []>} : vector<8x128xf32>, vector<128x128xf32>, vector<8x128xf32> -> vector<8x128xf32>
    %343 = arith.addf %341, %342 : vector<8x128xf32>
    %344 = math.tanh %343 : vector<8x128xf32>
    %345 = arith.index_cast %c6_i32_187 : i32 to index
    %c0_194 = arith.constant 0 : index
    %c0_195 = arith.constant 0 : index
    %346 = vector.load %arg12[%345, %c0_194, %c0_195] : memref<8x8x128xf32, #tpu.memory_space<vmem>>, vector<1x8x128xf32>
    %347 = vector.shape_cast %346 : vector<1x8x128xf32> to vector<8x128xf32>
    %348 = vector.shape_cast %344 : vector<8x128xf32> to vector<1x8x128xf32>
    %349 = vector.shape_cast %2 : vector<8x128xi1> to vector<1x8x128xi1>
    tpu.vector_store %arg12[%345, %c0_194, %c0_195], %348 masked %349 {strides = array<i32>} : memref<8x8x128xf32, #tpu.memory_space<vmem>>, vector<1x8x128xf32>, vector<1x8x128xi1>
    %c7_i32_196 = arith.constant 7 : i32
    %350 = arith.subi %c7_i32_196, %c6_i32_187 : i32
    %351 = arith.index_cast %350 : i32 to index
    %c0_197 = arith.constant 0 : index
    %c0_198 = arith.constant 0 : index
    %352 = vector.load %arg12[%351, %c0_197, %c0_198] : memref<8x8x128xf32, #tpu.memory_space<vmem>>, vector<1x8x128xf32>
    %353 = vector.shape_cast %352 : vector<1x8x128xf32> to vector<8x128xf32>
    %354 = vector.shape_cast %344 : vector<8x128xf32> to vector<1x8x128xf32>
    %355 = vector.shape_cast %3 : vector<8x128xi1> to vector<1x8x128xi1>
    tpu.vector_store %arg12[%351, %c0_197, %c0_198], %354 masked %355 {strides = array<i32>} : memref<8x8x128xf32, #tpu.memory_space<vmem>>, vector<1x8x128xf32>, vector<1x8x128xi1>
    %c7_i32_199 = arith.constant 7 : i32
    %356 = arith.index_cast %c7_i32_199 : i32 to index
    %c0_200 = arith.constant 0 : index
    %c0_201 = arith.constant 0 : index
    %357 = vector.load %arg11[%356, %c0_200, %c0_201] : memref<8x8x128xf32, #tpu.memory_space<vmem>>, vector<1x8x128xf32>
    %358 = vector.shape_cast %357 : vector<1x8x128xf32> to vector<8x128xf32>
    %c7_i32_202 = arith.constant 7 : i32
    %359 = arith.subi %c7_i32_202, %c7_i32_199 : i32
    %360 = arith.index_cast %359 : i32 to index
    %c0_203 = arith.constant 0 : index
    %c0_204 = arith.constant 0 : index
    %361 = vector.load %arg11[%360, %c0_203, %c0_204] : memref<8x8x128xf32, #tpu.memory_space<vmem>>, vector<1x8x128xf32>
    %362 = vector.shape_cast %361 : vector<1x8x128xf32> to vector<8x128xf32>
    %363 = arith.select %2, %358, %362 : vector<8x128xi1>, vector<8x128xf32>
    %cst_205 = arith.constant dense<0.000000e+00> : vector<8x128xf32>
    %364 = tpu.matmul %344, %194, %cst_205 {dimension_numbers = #tpu.dot_dimension_numbers<[1], [0], [0], [1], [0, 0, 1, 1], [], []>} : vector<8x128xf32>, vector<128x128xf32>, vector<8x128xf32> -> vector<8x128xf32>
    %365 = arith.addf %363, %364 : vector<8x128xf32>
    %366 = math.tanh %365 : vector<8x128xf32>
    %367 = arith.index_cast %c7_i32_199 : i32 to index
    %c0_206 = arith.constant 0 : index
    %c0_207 = arith.constant 0 : index
    %368 = vector.load %arg12[%367, %c0_206, %c0_207] : memref<8x8x128xf32, #tpu.memory_space<vmem>>, vector<1x8x128xf32>
    %369 = vector.shape_cast %368 : vector<1x8x128xf32> to vector<8x128xf32>
    %370 = vector.shape_cast %366 : vector<8x128xf32> to vector<1x8x128xf32>
    %371 = vector.shape_cast %2 : vector<8x128xi1> to vector<1x8x128xi1>
    tpu.vector_store %arg12[%367, %c0_206, %c0_207], %370 masked %371 {strides = array<i32>} : memref<8x8x128xf32, #tpu.memory_space<vmem>>, vector<1x8x128xf32>, vector<1x8x128xi1>
    %c7_i32_208 = arith.constant 7 : i32
    %372 = arith.subi %c7_i32_208, %c7_i32_199 : i32
    %373 = arith.index_cast %372 : i32 to index
    %c0_209 = arith.constant 0 : index
    %c0_210 = arith.constant 0 : index
    %374 = vector.load %arg12[%373, %c0_209, %c0_210] : memref<8x8x128xf32, #tpu.memory_space<vmem>>, vector<1x8x128xf32>
    %375 = vector.shape_cast %374 : vector<1x8x128xf32> to vector<8x128xf32>
    %376 = vector.shape_cast %366 : vector<8x128xf32> to vector<1x8x128xf32>
    %377 = vector.shape_cast %3 : vector<8x128xi1> to vector<1x8x128xi1>
    tpu.vector_store %arg12[%373, %c0_209, %c0_210], %376 masked %377 {strides = array<i32>} : memref<8x8x128xf32, #tpu.memory_space<vmem>>, vector<1x8x128xf32>, vector<1x8x128xi1>
    %c8_i32_211 = arith.constant 8 : i32
    %c0_212 = arith.constant 0 : index
    %c0_213 = arith.constant 0 : index
    %c0_214 = arith.constant 0 : index
    %378 = vector.load %arg12[%c0_212, %c0_213, %c0_214] : memref<8x8x128xf32, #tpu.memory_space<vmem>>, vector<8x8x128xf32>
    %379 = vector.shape_cast %378 : vector<8x8x128xf32> to vector<64x128xf32>
    %c0_215 = arith.constant 0 : index
    %c0_216 = arith.constant 0 : index
    %380 = vector.load %arg8[%c0_215, %c0_216] : memref<128x128xf32, #tpu.memory_space<vmem>>, vector<128x128xf32>
    %cst_217 = arith.constant dense<0.000000e+00> : vector<64x128xf32>
    %381 = tpu.matmul %379, %380, %cst_217 {dimension_numbers = #tpu.dot_dimension_numbers<[1], [0], [0], [1], [0, 0, 1, 1], [], []>} : vector<64x128xf32>, vector<128x128xf32>, vector<64x128xf32> -> vector<64x128xf32>
    %c0_218 = arith.constant 0 : index
    %c0_219 = arith.constant 0 : index
    %382 = vector.load %arg9[%c0_218, %c0_219] : memref<1x128xf32, #tpu.memory_space<vmem>>, vector<1x128xf32>
    %383 = vector.broadcast %382 : vector<1x128xf32> to vector<64x128xf32>
    %384 = arith.addf %381, %383 : vector<64x128xf32>
    %385 = vector.shape_cast %384 : vector<64x128xf32> to vector<8x8x128xf32>
    %c0_220 = arith.constant 0 : index
    %c0_221 = arith.constant 0 : index
    %c0_222 = arith.constant 0 : index
    %386 = vector.load %arg10[%c0_220, %c0_221, %c0_222] : memref<8x8x128xf32, #tpu.memory_space<vmem>>, vector<8x8x128xf32>
    tpu.vector_store %arg10[%c0_220, %c0_221, %c0_222], %385 {strides = array<i32>} : memref<8x8x128xf32, #tpu.memory_space<vmem>>, vector<8x8x128xf32>,
    return
  }
  func.func @transform_0(%arg0: i32) -> (i32, i32, i32) {
    %c0_i32 = arith.constant 0 : i32
    %c0_i32_0 = arith.constant 0 : i32
    %c0_i32_1 = arith.constant 0 : i32
    return %c0_i32, %arg0, %c0_i32_0 : i32, i32, i32
  }
  func.func @transform_1(%arg0: i32) -> (i32, i32) {
    %c0_i32 = arith.constant 0 : i32
    %c0_i32_0 = arith.constant 0 : i32
    %c0_i32_1 = arith.constant 0 : i32
    return %c0_i32, %c0_i32_0 : i32, i32
  }
  func.func @transform_2(%arg0: i32) -> (i32, i32) {
    %c0_i32 = arith.constant 0 : i32
    %c0_i32_0 = arith.constant 0 : i32
    %c0_i32_1 = arith.constant 0 : i32
    return %c0_i32, %c0_i32_0 : i32, i32
  }
  func.func @transform_3(%arg0: i32) -> (i32, i32) {
    %c0_i32 = arith.constant 0 : i32
    %c0_i32_0 = arith.constant 0 : i32
    %c0_i32_1 = arith.constant 0 : i32
    return %c0_i32, %c0_i32_0 : i32, i32
  }
  func.func @transform_4(%arg0: i32) -> (i32, i32) {
    %c0_i32 = arith.constant 0 : i32
    %c0_i32_0 = arith.constant 0 : i32
    %c0_i32_1 = arith.constant 0 : i32
    return %c0_i32, %c0_i32_0 : i32, i32
  }
  func.func @transform_5(%arg0: i32) -> (i32, i32) {
    %c0_i32 = arith.constant 0 : i32
    %c0_i32_0 = arith.constant 0 : i32
    %c0_i32_1 = arith.constant 0 : i32
    return %c0_i32, %c0_i32_0 : i32, i32
  }
  func.func @transform_6(%arg0: i32) -> (i32, i32) {
    %c0_i32 = arith.constant 0 : i32
    %c0_i32_0 = arith.constant 0 : i32
    %c0_i32_1 = arith.constant 0 : i32
    return %c0_i32, %c0_i32_0 : i32, i32
  }
  func.func @transform_7(%arg0: i32) -> (i32, i32) {
    %c0_i32 = arith.constant 0 : i32
    %c0_i32_0 = arith.constant 0 : i32
    %c0_i32_1 = arith.constant 0 : i32
    return %c0_i32, %c0_i32_0 : i32, i32
  }
  func.func @transform_8(%arg0: i32) -> (i32, i32) {
    %c0_i32 = arith.constant 0 : i32
    %c0_i32_0 = arith.constant 0 : i32
    %c0_i32_1 = arith.constant 0 : i32
    return %c0_i32, %c0_i32_0 : i32, i32
  }
  func.func @transform_9(%arg0: i32) -> (i32, i32, i32) {
    %c0_i32 = arith.constant 0 : i32
    %c0_i32_0 = arith.constant 0 : i32
    %c0_i32_1 = arith.constant 0 : i32
    return %c0_i32, %arg0, %c0_i32_0 : i32, i32, i32
  }
}

</mosaic_0001>

<llo_original>
// kernel: rnn_classifier_forward.1
$region0: #{rnn_classifier_forward.1}
  #allocation0 [shape = 'u32[]', space=smem, size = 0x4, offset = 0x4, fixed_abs, tag = 'smem constant byte address 0x4 - core index']
  #allocation1 [shape = 'u32[144,128]{1,0:T(1,128)}', space=vmem, size = 0x12000, scoped, tag = 'internal scratch']
  #allocation2 [shape = 'f32[8,8,128]{2,1,0:T(8,128)}', space=vmem, size = 0x8000, scoped, tag = 'scratch operand']
  #allocation3 [shape = 'f32[8,8,128]{2,1,0:T(8,128)}', space=vmem, size = 0x8000, scoped, tag = 'scratch operand']
  %s0 = inlined_call_operand.vmem [shape: f32[8,8,16], index: 0, kind: input, shape index: {}]
  %s1 = inlined_call_operand.hbm [shape: f32[16,128], index: 1, kind: input, shape index: {}]
  %s2 = inlined_call_operand.vmem [shape: f32[128,128], index: 2, kind: input, shape index: {}]
  %s3 = inlined_call_operand.hbm [shape: f32[1,128], index: 3, kind: input, shape index: {}]
  %s4 = inlined_call_operand.hbm [shape: f32[128,128], index: 4, kind: input, shape index: {}]
  %s5 = inlined_call_operand.hbm [shape: f32[128,128], index: 5, kind: input, shape index: {}]
  %s6 = inlined_call_operand.hbm [shape: f32[1,128], index: 6, kind: input, shape index: {}]
  %s7 = inlined_call_operand.hbm [shape: f32[128,128], index: 7, kind: input, shape index: {}]
  %s8 = inlined_call_operand.hbm [shape: f32[1,128], index: 8, kind: input, shape index: {}]
  %s9 = inlined_call_operand.vmem [shape: f32[8,8,128], index: 9, kind: output, shape index: {}]
  %s10 = sld [smem:[#allocation0]]
  $region74: #{rnn_classifier_forward.1} parent=0
    _
  %s12 = ssub.s32 1, %s10
  %s13 = scalar_select 0, %s12, %s10
  $region1: #{rnn_classifier_forward.1} parent=0
    #allocation4 [shape = 'u8[8192]{0}', space=vmem, size = 0x2000, scoped, tag = 'input window, operand 1, single buffered']
    #allocation5 [shape = 's32[1]{0}', space=sflag, size = 0x4, scoped, tag = 'scoped memory for rnn_classifier_forward.1']
    #allocation6 [shape = 'u8[512]{0}', space=vmem, size = 0x400, scoped, tag = 'input window, operand 3, single buffered']
    #allocation7 [shape = 's32[1]{0}', space=sflag, size = 0x4, scoped, tag = 'scoped memory for rnn_classifier_forward.1']
    #allocation8 [shape = 'u8[65536]{0}', space=vmem, size = 0x10000, scoped, tag = 'input window, operand 4, single buffered']
    #allocation9 [shape = 'u8[65536]{0}', space=vmem, size = 0x10000, scoped, tag = 'input window, operand 5, single buffered']
    #allocation10 [shape = 's32[1]{0}', space=sflag, size = 0x4, scoped, tag = 'scoped memory for rnn_classifier_forward.1']
    #allocation11 [shape = 'u8[512]{0}', space=vmem, size = 0x400, scoped, tag = 'input window, operand 6, single buffered']
    #allocation12 [shape = 'u8[65536]{0}', space=vmem, size = 0x10000, scoped, tag = 'input window, operand 7, single buffered']
    #allocation13 [shape = 's32[1]{0}', space=sflag, size = 0x4, scoped, tag = 'scoped memory for rnn_classifier_forward.1']
    #allocation14 [shape = 'u8[512]{0}', space=vmem, size = 0x400, scoped, tag = 'input window, operand 8, single buffered']
    %14 = vsyncpa [#allocation5], 0
    %15 = vsyncpa [#allocation7], 0
    %16 = vsyncpa [#allocation10], 0
    %17 = vsyncpa [#allocation13], 0
    // Predicated region
    $region2: #{rnn_classifier_forward.1} parent=1 // pred_check
      _
    $region3: #{rnn_classifier_forward.1} parent=1 // pred_check_branch
      %19 = sbr.rel (0) target = $region5
    $region4: #{rnn_classifier_forward.1} parent=1 // pred_region
      _
    $region5: #{rnn_classifier_forward.1} parent=1 // pred_fallthru
      _
    // Predicated region
    $region6: #{rnn_classifier_forward.1} parent=1 // pred_check
      _
    $region7: #{rnn_classifier_forward.1} parent=1 // pred_check_branch
      %21 = sbr.rel (0) target = $region9
    $region8: #{rnn_classifier_forward.1} parent=1 // pred_region
      %s23 = ssub.s32 256, 256
      %24 = vsyncadd [#allocation5], %s23
      %s25 = sshll.u32 [#allocation4], 4
      %s26 = int_to_ptr.vmem [resolvable:$true] %s25
      %31 = dma.hbm_to_vmem [thread:$0]  %s1, 256, %s26, [#allocation5], 128, 128, 8
    $region9: #{rnn_classifier_forward.1} parent=1 // pred_fallthru
      _
    // Predicated region
    $region10: #{rnn_classifier_forward.1} parent=1 // pred_check
      _
    $region11: #{rnn_classifier_forward.1} parent=1 // pred_check_branch
      %33 = sbr.rel (0) target = $region13
    $region12: #{rnn_classifier_forward.1} parent=1 // pred_region
      _
    $region13: #{rnn_classifier_forward.1} parent=1 // pred_fallthru
      _
    // Predicated region
    $region14: #{rnn_classifier_forward.1} parent=1 // pred_check
      _
    $region15: #{rnn_classifier_forward.1} parent=1 // pred_check_branch
      %35 = sbr.rel (0) target = $region17
    $region16: #{rnn_classifier_forward.1} parent=1 // pred_region
      %s37 = ssub.s32 16, 16
      %38 = vsyncadd [#allocation7], %s37
      %s40 = sshll.u32 [#allocation6], 4
      %s41 = int_to_ptr.vmem [resolvable:$true] %s40
      %43 = dma.hbm_to_vmem [thread:$0]  %s3, 16, %s41, [#allocation7]
    $region17: #{rnn_classifier_forward.1} parent=1 // pred_fallthru
      _
    // Predicated region
    $region18: #{rnn_classifier_forward.1} parent=1 // pred_check
      _
    $region19: #{rnn_classifier_forward.1} parent=1 // pred_check_branch
      %45 = sbr.rel (0) target = $region21
    $region20: #{rnn_classifier_forward.1} parent=1 // pred_region
      %s47 = ssub.s32 2048, 2048
      %48 = vsyncadd [#allocation7], %s47
      %s49 = sshll.u32 [#allocation8], 4
      %s50 = int_to_ptr.vmem [resolvable:$true] %s49
      %55 = dma.hbm_to_vmem [thread:$0]  %s4, 2048, %s50, [#allocation7], 128, 128, 8
    $region21: #{rnn_classifier_forward.1} parent=1 // pred_fallthru
      _
    // Predicated region
    $region22: #{rnn_classifier_forward.1} parent=1 // pred_check
      _
    $region23: #{rnn_classifier_forward.1} parent=1 // pred_check_branch
      %57 = sbr.rel (0) target = $region25
    $region24: #{rnn_classifier_forward.1} parent=1 // pred_region
      %s59 = ssub.s32 2048, 2048
      %60 = vsyncadd [#allocation10], %s59
      %s61 = sshll.u32 [#allocation9], 4
      %s62 = int_to_ptr.vmem [resolvable:$true] %s61
      %67 = dma.hbm_to_vmem [thread:$0]  %s5, 2048, %s62, [#allocation10], 128, 128, 8
    $region25: #{rnn_classifier_forward.1} parent=1 // pred_fallthru
      _
    // Predicated region
    $region26: #{rnn_classifier_forward.1} parent=1 // pred_check
      _
    $region27: #{rnn_classifier_forward.1} parent=1 // pred_check_branch
      %69 = sbr.rel (0) target = $region29
    $region28: #{rnn_classifier_forward.1} parent=1 // pred_region
      %s71 = ssub.s32 16, 16
      %72 = vsyncadd [#allocation10], %s71
      %s74 = sshll.u32 [#allocation11], 4
      %s75 = int_to_ptr.vmem [resolvable:$true] %s74
      %77 = dma.hbm_to_vmem [thread:$0]  %s6, 16, %s75, [#allocation10]
    $region29: #{rnn_classifier_forward.1} parent=1 // pred_fallthru
      _
    // Predicated region
    $region30: #{rnn_classifier_forward.1} parent=1 // pred_check
      _
    $region31: #{rnn_classifier_forward.1} parent=1 // pred_check_branch
      %79 = sbr.rel (0) target = $region33
    $region32: #{rnn_classifier_forward.1} parent=1 // pred_region
      %s81 = ssub.s32 2048, 2048
      %82 = vsyncadd [#allocation13], %s81
      %s83 = sshll.u32 [#allocation12], 4
      %s84 = int_to_ptr.vmem [resolvable:$true] %s83
      %89 = dma.hbm_to_vmem [thread:$0]  %s7, 2048, %s84, [#allocation13], 128, 128, 8
    $region33: #{rnn_classifier_forward.1} parent=1 // pred_fallthru
      _
    // Predicated region
    $region34: #{rnn_classifier_forward.1} parent=1 // pred_check
      _
    $region35: #{rnn_classifier_forward.1} parent=1 // pred_check_branch
      %91 = sbr.rel (0) target = $region37
    $region36: #{rnn_classifier_forward.1} parent=1 // pred_region
      %s93 = ssub.s32 16, 16
      %94 = vsyncadd [#allocation13], %s93
      %s96 = sshll.u32 [#allocation14], 4
      %s97 = int_to_ptr.vmem [resolvable:$true] %s96
      %99 = dma.hbm_to_vmem [thread:$0]  %s8, 16, %s97, [#allocation13]
    $region37: #{rnn_classifier_forward.1} parent=1 // pred_fallthru
      _
    // Predicated region
    $region38: #{rnn_classifier_forward.1} parent=1 // pred_check
      _
    $region39: #{rnn_classifier_forward.1} parent=1 // pred_check_branch
      %101 = sbr.rel (0) target = $region41
    $region40: #{rnn_classifier_forward.1} parent=1 // pred_region
      %102 = dma.done [#allocation5], 256
    $region41: #{rnn_classifier_forward.1} parent=1 // pred_fallthru
      _
    // Predicated region
    $region42: #{rnn_classifier_forward.1} parent=1 // pred_check
      _
    $region43: #{rnn_classifier_forward.1} parent=1 // pred_check_branch
      %104 = sbr.rel (0) target = $region45
    $region44: #{rnn_classifier_forward.1} parent=1 // pred_region
      %105 = dma.done [#allocation7], 16
    $region45: #{rnn_classifier_forward.1} parent=1 // pred_fallthru
      _
    // Predicated region
    $region46: #{rnn_classifier_forward.1} parent=1 // pred_check
      _
    $region47: #{rnn_classifier_forward.1} parent=1 // pred_check_branch
      %107 = sbr.rel (0) target = $region49
    $region48: #{rnn_classifier_forward.1} parent=1 // pred_region
      %108 = dma.done [#allocation7], 2048
    $region49: #{rnn_classifier_forward.1} parent=1 // pred_fallthru
      _
    // Predicated region
    $region50: #{rnn_classifier_forward.1} parent=1 // pred_check
      _
    $region51: #{rnn_classifier_forward.1} parent=1 // pred_check_branch
      %110 = sbr.rel (0) target = $region53
    $region52: #{rnn_classifier_forward.1} parent=1 // pred_region
      %111 = dma.done [#allocation10], 2048
    $region53: #{rnn_classifier_forward.1} parent=1 // pred_fallthru
      _
    // Predicated region
    $region54: #{rnn_classifier_forward.1} parent=1 // pred_check
      _
    $region55: #{rnn_classifier_forward.1} parent=1 // pred_check_branch
      %113 = sbr.rel (0) target = $region57
    $region56: #{rnn_classifier_forward.1} parent=1 // pred_region
      %114 = dma.done [#allocation10], 16
    $region57: #{rnn_classifier_forward.1} parent=1 // pred_fallthru
      _
    // Predicated region
    $region58: #{rnn_classifier_forward.1} parent=1 // pred_check
      _
    $region59: #{rnn_classifier_forward.1} parent=1 // pred_check_branch
      %116 = sbr.rel (0) target = $region61
    $region60: #{rnn_classifier_forward.1} parent=1 // pred_region
      %117 = dma.done [#allocation13], 2048
    $region61: #{rnn_classifier_forward.1} parent=1 // pred_fallthru
      _
    // Predicated region
    $region62: #{rnn_classifier_forward.1} parent=1 // pred_check
      _
    $region63: #{rnn_classifier_forward.1} parent=1 // pred_check_branch
      %119 = sbr.rel (0) target = $region65
    $region64: #{rnn_classifier_forward.1} parent=1 // pred_region
      %120 = dma.done [#allocation13], 16
    $region65: #{rnn_classifier_forward.1} parent=1 // pred_fallthru
      _
    %v121 = vlaneseq
    %v122 = vand.u32 %v121, 127
    %vm123 = vcmp.lt.s32.totalorder %v122, 64
    %vm124 = vmxor %vm123, 1
    %v125 = vld [vmem:[%s0] sm:$0xff]
    %v126 = vld [vmem:[%s0 + $0x8] sm:$0xff]
    %v127 = vld [vmem:[%s0 + $0x10] sm:$0xff]
    %v128 = vld [vmem:[%s0 + $0x18] sm:$0xff]
    %v129 = vld [vmem:[%s0 + $0x20] sm:$0xff]
    %v130 = vld [vmem:[%s0 + $0x28] sm:$0xff]
    %v131 = vld [vmem:[%s0 + $0x30] sm:$0xff]
    %v132 = vld [vmem:[%s0 + $0x38] sm:$0xff]
    %v133 = vld [vmem:[#allocation4] sm:$0xff]
    %v134 = vld [vmem:[#allocation4 + $0x8] sm:$0xff]
    %v135 = vld [vmem:[%s2] sm:$0xff]
    %v136 = vld [vmem:[%s2 + $0x8] sm:$0xff]
    %v137 = vld [vmem:[%s2 + $0x10] sm:$0xff]
    %v138 = vld [vmem:[%s2 + $0x18] sm:$0xff]
    %v139 = vld [vmem:[%s2 + $0x20] sm:$0xff]
    %v140 = vld [vmem:[%s2 + $0x28] sm:$0xff]
    %v141 = vld [vmem:[%s2 + $0x30] sm:$0xff]
    %v142 = vld [vmem:[%s2 + $0x38] sm:$0xff]
    %v143 = vld [vmem:[%s2 + $0x40] sm:$0xff]
    %v144 = vld [vmem:[%s2 + $0x48] sm:$0xff]
    %v145 = vld [vmem:[%s2 + $0x50] sm:$0xff]
    %v146 = vld [vmem:[%s2 + $0x58] sm:$0xff]
    %v147 = vld [vmem:[%s2 + $0x60] sm:$0xff]
    %v148 = vld [vmem:[%s2 + $0x68] sm:$0xff]
    %v149 = vld [vmem:[%s2 + $0x70] sm:$0xff]
    %v150 = vld [vmem:[%s2 + $0x78] sm:$0xff]
    %v151 = vld [vmem:[#allocation6] sm:$0x1]
    %v153 = vlaneseq
    %v154 = vshrl.u32 %v153, 7
    %v155 = vsub.s32 0, %v154
    %v156 = vrot.slane %v151, %v155
    %vm158 = vcmask 130048
    %v160 = vsel %vm158, %v125, 0
    %v163 = vsel %vm158, %v126, 0
    %v166 = vsel %vm158, %v127, 0
    %v169 = vsel %vm158, %v128, 0
    %v172 = vsel %vm158, %v129, 0
    %v175 = vsel %vm158, %v130, 0
    %v178 = vsel %vm158, %v131, 0
    %v181 = vsel %vm158, %v132, 0
    %183 = vmatprep.subr.mxu0 0.0
    %184 = vmatpush1.msra.mxu0 %v133
    %185 = vmatprep.subr.mxu0 0.0
    %186 = vmatpush1.msra.mxu0 %v134
    %187 = vmatprep.subr.mxu0 0.0
    %188 = vmatpush1.msra.mxu0 0.0
    %189 = vmatprep.subr.mxu0 0.0
    %190 = vmatpush1.msra.mxu0 0.0
    %191 = vmatprep.subr.mxu0 0.0
    %192 = vmatpush1.msra.mxu0 0.0
    %193 = vmatprep.subr.mxu0 0.0
    %194 = vmatpush1.msra.mxu0 0.0
    %195 = vmatprep.subr.mxu0 0.0
    %196 = vmatpush1.msra.mxu0 0.0
    %197 = vmatprep.subr.mxu0 0.0
    %198 = vmatpush1.msra.mxu0 0.0
    %199 = vmatprep.subr.mxu0 0.0
    %200 = vmatpush1.msra.mxu0 0.0
    %201 = vmatprep.subr.mxu0 0.0
    %202 = vmatpush1.msra.mxu0 0.0
    %203 = vmatprep.subr.mxu0 0.0
    %204 = vmatpush1.msra.mxu0 0.0
    %205 = vmatprep.subr.mxu0 0.0
    %206 = vmatpush1.msra.mxu0 0.0
    %207 = vmatprep.subr.mxu0 0.0
    %208 = vmatpush1.msra.mxu0 0.0
    %209 = vmatprep.subr.mxu0 0.0
    %210 = vmatpush1.msra.mxu0 0.0
    %211 = vmatprep.subr.mxu0 0.0
    %212 = vmatpush1.msra.mxu0 0.0
    %213 = vmatprep.subr.mxu0 0.0
    %214 = vmatpush1.msra.mxu0 0.0
    %215 = vmatprep.subr.mxu0 0.0
    %216 = vmatpush1.msra.mxu0 0.0
    %217 = vmatprep.subr.mxu0 0.0
    %218 = vmatpush1.msra.mxu0 0.0
    %219 = vmatprep.subr.mxu0 0.0
    %220 = vmatpush1.msra.mxu0 0.0
    %221 = vmatprep.subr.mxu0 0.0
    %222 = vmatpush1.msra.mxu0 0.0
    %223 = vmatprep.subr.mxu0 0.0
    %224 = vmatpush1.msra.mxu0 0.0
    %225 = vmatprep.subr.mxu0 0.0
    %226 = vmatpush1.msra.mxu0 0.0
    %227 = vmatprep.subr.mxu0 0.0
    %228 = vmatpush1.msra.mxu0 0.0
    %229 = vmatprep.subr.mxu0 0.0
    %230 = vmatpush1.msra.mxu0 0.0
    %231 = vmatprep.subr.mxu0 0.0
    %232 = vmatpush1.msra.mxu0 0.0
    %233 = vmatprep.subr.mxu0 0.0
    %234 = vmatpush1.msra.mxu0 0.0
    %235 = vmatprep.subr.mxu0 0.0
    %236 = vmatpush1.msra.mxu0 0.0
    %237 = vmatprep.subr.mxu0 0.0
    %238 = vmatpush1.msra.mxu0 0.0
    %239 = vmatprep.subr.mxu0 0.0
    %240 = vmatpush1.msra.mxu0 0.0
    %241 = vmatprep.subr.mxu0 0.0
    %242 = vmatpush1.msra.mxu0 0.0
    %243 = vmatprep.subr.mxu0 0.0
    %244 = vmatpush1.msra.mxu0 0.0
    %245 = vmatprep.subr.mxu0 0.0
    %246 = vmatpush1.msra.mxu0 0.0
    %247 = vmatprep.mubr.f32.mxu0 0.0
    %248 = vmatmul.mubr.f32.gmra.mrb[0].mxu0 %v160
    %v249 = vpop.f32.mrb[0].mxu0
    %v250 = vadd.f32 %v156, %v249
    %v251 = vpop.f32.mrb[0].mxu0
    %252 = vmatprep.mubr.f32.mxu0 0.0
    %253 = vmatmul.mubr.f32.gmra.mrb[0].mxu0 %v163
    %v254 = vpop.f32.mrb[0].mxu0
    %v255 = vadd.f32 %v156, %v254
    %v256 = vpop.f32.mrb[0].mxu0
    %257 = vmatprep.mubr.f32.mxu0 0.0
    %258 = vmatmul.mubr.f32.gmra.mrb[0].mxu0 %v166
    %v259 = vpop.f32.mrb[0].mxu0
    %v260 = vadd.f32 %v156, %v259
    %v261 = vpop.f32.mrb[0].mxu0
    %262 = vmatprep.mubr.f32.mxu0 0.0
    %263 = vmatmul.mubr.f32.gmra.mrb[0].mxu0 %v169
    %v264 = vpop.f32.mrb[0].mxu0
    %v265 = vadd.f32 %v156, %v264
    %v266 = vpop.f32.mrb[0].mxu0
    %267 = vmatprep.mubr.f32.mxu0 0.0
    %268 = vmatmul.mubr.f32.gmra.mrb[0].mxu0 %v172
    %v269 = vpop.f32.mrb[0].mxu0
    %v270 = vadd.f32 %v156, %v269
    %v271 = vpop.f32.mrb[0].mxu0
    %272 = vmatprep.mubr.f32.mxu0 0.0
    %273 = vmatmul.mubr.f32.gmra.mrb[0].mxu0 %v175
    %v274 = vpop.f32.mrb[0].mxu0
    %v275 = vadd.f32 %v156, %v274
    %v276 = vpop.f32.mrb[0].mxu0
    %277 = vmatprep.mubr.f32.mxu0 0.0
    %278 = vmatmul.mubr.f32.gmra.mrb[0].mxu0 %v178
    %v279 = vpop.f32.mrb[0].mxu0
    %v280 = vadd.f32 %v156, %v279
    %v281 = vpop.f32.mrb[0].mxu0
    %282 = vmatprep.mubr.f32.mxu0 0.0
    %283 = vmatmul.mubr.f32.gmra.mrb[0].mxu0 %v181
    %v284 = vpop.f32.mrb[0].mxu0
    %v285 = vadd.f32 %v156, %v284
    %v286 = vpop.f32.mrb[0].mxu0
    %287 = vdwg.mxu0
    %288 = vst [vmem:[#allocation2] sm:$0xff] %v250
    %289 = vst [vmem:[#allocation2 + $0x8] sm:$0xff] %v255
    %290 = vst [vmem:[#allocation2 + $0x10] sm:$0xff] %v260
    %291 = vst [vmem:[#allocation2 + $0x18] sm:$0xff] %v265
    %292 = vst [vmem:[#allocation2 + $0x20] sm:$0xff] %v270
    %293 = vst [vmem:[#allocation2 + $0x28] sm:$0xff] %v275
    %294 = vst [vmem:[#allocation2 + $0x30] sm:$0xff] %v280
    %295 = vst [vmem:[#allocation2 + $0x38] sm:$0xff] %v285
    %v296 = vld [vmem:[#allocation2] sm:$0xff]
    %s297 = scalar_lea.vmem [#allocation2], 56
    %v298 = vld [vmem:[%s297] sm:$0xff]
    %v299 = vsel %vm123, %v296, %v298
    %300 = vmatprep.subr.mxu0 0.0
    %301 = vmatpush1.msra.mxu0 %v135
    %302 = vmatprep.subr.mxu0 0.0
    %303 = vmatpush1.msra.mxu0 %v136
    %304 = vmatprep.subr.mxu0 0.0
    %305 = vmatpush1.msra.mxu0 %v137
    %306 = vmatprep.subr.mxu0 0.0
    %307 = vmatpush1.msra.mxu0 %v138
    %308 = vmatprep.subr.mxu0 0.0
    %309 = vmatpush1.msra.mxu0 %v139
    %310 = vmatprep.subr.mxu0 0.0
    %311 = vmatpush1.msra.mxu0 %v140
    %312 = vmatprep.subr.mxu0 0.0
    %313 = vmatpush1.msra.mxu0 %v141
    %314 = vmatprep.subr.mxu0 0.0
    %315 = vmatpush1.msra.mxu0 %v142
    %316 = vmatprep.subr.mxu0 0.0
    %317 = vmatpush1.msra.mxu0 %v143
    %318 = vmatprep.subr.mxu0 0.0
    %319 = vmatpush1.msra.mxu0 %v144
    %320 = vmatprep.subr.mxu0 0.0
    %321 = vmatpush1.msra.mxu0 %v145
    %322 = vmatprep.subr.mxu0 0.0
    %323 = vmatpush1.msra.mxu0 %v146
    %324 = vmatprep.subr.mxu0 0.0
    %325 = vmatpush1.msra.mxu0 %v147
    %326 = vmatprep.subr.mxu0 0.0
    %327 = vmatpush1.msra.mxu0 %v148
    %328 = vmatprep.subr.mxu0 0.0
    %329 = vmatpush1.msra.mxu0 %v149
    %330 = vmatprep.subr.mxu0 0.0
    %331 = vmatpush1.msra.mxu0 %v150
    %332 = vmatprep.subr.mxu0 0.0
    %333 = vmatpush1.msra.mxu0 0.0
    %334 = vmatprep.subr.mxu0 0.0
    %335 = vmatpush1.msra.mxu0 0.0
    %336 = vmatprep.subr.mxu0 0.0
    %337 = vmatpush1.msra.mxu0 0.0
    %338 = vmatprep.subr.mxu0 0.0
    %339 = vmatpush1.msra.mxu0 0.0
    %340 = vmatprep.subr.mxu0 0.0
    %341 = vmatpush1.msra.mxu0 0.0
    %342 = vmatprep.subr.mxu0 0.0
    %343 = vmatpush1.msra.mxu0 0.0
    %344 = vmatprep.subr.mxu0 0.0
    %345 = vmatpush1.msra.mxu0 0.0
    %346 = vmatprep.subr.mxu0 0.0
    %347 = vmatpush1.msra.mxu0 0.0
    %348 = vmatprep.subr.mxu0 0.0
    %349 = vmatpush1.msra.mxu0 0.0
    %350 = vmatprep.subr.mxu0 0.0
    %351 = vmatpush1.msra.mxu0 0.0
    %352 = vmatprep.subr.mxu0 0.0
    %353 = vmatpush1.msra.mxu0 0.0
    %354 = vmatprep.subr.mxu0 0.0
    %355 = vmatpush1.msra.mxu0 0.0
    %356 = vmatprep.subr.mxu0 0.0
    %357 = vmatpush1.msra.mxu0 0.0
    %358 = vmatprep.subr.mxu0 0.0
    %359 = vmatpush1.msra.mxu0 0.0
    %360 = vmatprep.subr.mxu0 0.0
    %361 = vmatpush1.msra.mxu0 0.0
    %362 = vmatprep.subr.mxu0 0.0
    %363 = vmatpush1.msra.mxu0 0.0
    %364 = vmatprep.mubr.f32.mxu0 0.0
    %365 = vmatmul.mubr.f32.gmra.mrb[0].mxu0 0.0
    %v366 = vpop.f32.mrb[0].mxu0
    %v367 = vadd.f32 0.0, %v366
    %v368 = vpop.f32.mrb[0].mxu0
    %369 = vdwg.mxu0
    %v370 = vadd.f32 %v299, %v367
    %v371 = vtanh.pop %v370
    %372 = vst.msk [vmem:[#allocation3] sm:$0xff] %vm123, %v371
    %s373 = scalar_lea.vmem [#allocation3], 56
    %374 = vst.msk [vmem:[%s373] sm:$0xff] %vm124, %v371
    %s375 = scalar_lea.vmem [#allocation2], 8
    %v376 = vld [vmem:[%s375] sm:$0xff]
    %s377 = scalar_lea.vmem [#allocation2], 48
    %v378 = vld [vmem:[%s377] sm:$0xff]
    %v379 = vsel %vm123, %v376, %v378
    %380 = vmatprep.subr.mxu0 0.0
    %381 = vmatpush1.msra.mxu0 %v135
    %382 = vmatprep.subr.mxu0 0.0
    %383 = vmatpush1.msra.mxu0 %v136
    %384 = vmatprep.subr.mxu0 0.0
    %385 = vmatpush1.msra.mxu0 %v137
    %386 = vmatprep.subr.mxu0 0.0
    %387 = vmatpush1.msra.mxu0 %v138
    %388 = vmatprep.subr.mxu0 0.0
    %389 = vmatpush1.msra.mxu0 %v139
    %390 = vmatprep.subr.mxu0 0.0
    %391 = vmatpush1.msra.mxu0 %v140
    %392 = vmatprep.subr.mxu0 0.0
    %393 = vmatpush1.msra.mxu0 %v141
    %394 = vmatprep.subr.mxu0 0.0
    %395 = vmatpush1.msra.mxu0 %v142
    %396 = vmatprep.subr.mxu0 0.0
    %397 = vmatpush1.msra.mxu0 %v143
    %398 = vmatprep.subr.mxu0 0.0
    %399 = vmatpush1.msra.mxu0 %v144
    %400 = vmatprep.subr.mxu0 0.0
    %401 = vmatpush1.msra.mxu0 %v145
    %402 = vmatprep.subr.mxu0 0.0
    %403 = vmatpush1.msra.mxu0 %v146
    %404 = vmatprep.subr.mxu0 0.0
    %405 = vmatpush1.msra.mxu0 %v147
    %406 = vmatprep.subr.mxu0 0.0
    %407 = vmatpush1.msra.mxu0 %v148
    %408 = vmatprep.subr.mxu0 0.0
    %409 = vmatpush1.msra.mxu0 %v149
    %410 = vmatprep.subr.mxu0 0.0
    %411 = vmatpush1.msra.mxu0 %v150
    %412 = vmatprep.subr.mxu0 0.0
    %413 = vmatpush1.msra.mxu0 0.0
    %414 = vmatprep.subr.mxu0 0.0
    %415 = vmatpush1.msra.mxu0 0.0
    %416 = vmatprep.subr.mxu0 0.0
    %417 = vmatpush1.msra.mxu0 0.0
    %418 = vmatprep.subr.mxu0 0.0
    %419 = vmatpush1.msra.mxu0 0.0
    %420 = vmatprep.subr.mxu0 0.0
    %421 = vmatpush1.msra.mxu0 0.0
    %422 = vmatprep.subr.mxu0 0.0
    %423 = vmatpush1.msra.mxu0 0.0
    %424 = vmatprep.subr.mxu0 0.0
    %425 = vmatpush1.msra.mxu0 0.0
    %426 = vmatprep.subr.mxu0 0.0
    %427 = vmatpush1.msra.mxu0 0.0
    %428 = vmatprep.subr.mxu0 0.0
    %429 = vmatpush1.msra.mxu0 0.0
    %430 = vmatprep.subr.mxu0 0.0
    %431 = vmatpush1.msra.mxu0 0.0
    %432 = vmatprep.subr.mxu0 0.0
    %433 = vmatpush1.msra.mxu0 0.0
    %434 = vmatprep.subr.mxu0 0.0
    %435 = vmatpush1.msra.mxu0 0.0
    %436 = vmatprep.subr.mxu0 0.0
    %437 = vmatpush1.msra.mxu0 0.0
    %438 = vmatprep.subr.mxu0 0.0
    %439 = vmatpush1.msra.mxu0 0.0
    %440 = vmatprep.subr.mxu0 0.0
    %441 = vmatpush1.msra.mxu0 0.0
    %442 = vmatprep.subr.mxu0 0.0
    %443 = vmatpush1.msra.mxu0 0.0
    %444 = vmatprep.mubr.f32.mxu0 0.0
    %445 = vmatmul.mubr.f32.gmra.mrb[0].mxu0 %v371
    %v446 = vpop.f32.mrb[0].mxu0
    %v447 = vadd.f32 0.0, %v446
    %v448 = vpop.f32.mrb[0].mxu0
    %449 = vdwg.mxu0
    %v450 = vadd.f32 %v379, %v447
    %v451 = vtanh.pop %v450
    %s452 = scalar_lea.vmem [#allocation3], 8
    %453 = vst.msk [vmem:[%s452] sm:$0xff] %vm123, %v451
    %s454 = scalar_lea.vmem [#allocation3], 48
    %455 = vst.msk [vmem:[%s454] sm:$0xff] %vm124, %v451
    %s456 = scalar_lea.vmem [#allocation2], 16
    %v457 = vld [vmem:[%s456] sm:$0xff]
    %s458 = scalar_lea.vmem [#allocation2], 40
    %v459 = vld [vmem:[%s458] sm:$0xff]
    %v460 = vsel %vm123, %v457, %v459
    %461 = vmatprep.subr.mxu0 0.0
    %462 = vmatpush1.msra.mxu0 %v135
    %463 = vmatprep.subr.mxu0 0.0
    %464 = vmatpush1.msra.mxu0 %v136
    %465 = vmatprep.subr.mxu0 0.0
    %466 = vmatpush1.msra.mxu0 %v137
    %467 = vmatprep.subr.mxu0 0.0
    %468 = vmatpush1.msra.mxu0 %v138
    %469 = vmatprep.subr.mxu0 0.0
    %470 = vmatpush1.msra.mxu0 %v139
    %471 = vmatprep.subr.mxu0 0.0
    %472 = vmatpush1.msra.mxu0 %v140
    %473 = vmatprep.subr.mxu0 0.0
    %474 = vmatpush1.msra.mxu0 %v141
    %475 = vmatprep.subr.mxu0 0.0
    %476 = vmatpush1.msra.mxu0 %v142
    %477 = vmatprep.subr.mxu0 0.0
    %478 = vmatpush1.msra.mxu0 %v143
    %479 = vmatprep.subr.mxu0 0.0
    %480 = vmatpush1.msra.mxu0 %v144
    %481 = vmatprep.subr.mxu0 0.0
    %482 = vmatpush1.msra.mxu0 %v145
    %483 = vmatprep.subr.mxu0 0.0
    %484 = vmatpush1.msra.mxu0 %v146
    %485 = vmatprep.subr.mxu0 0.0
    %486 = vmatpush1.msra.mxu0 %v147
    %487 = vmatprep.subr.mxu0 0.0
    %488 = vmatpush1.msra.mxu0 %v148
    %489 = vmatprep.subr.mxu0 0.0
    %490 = vmatpush1.msra.mxu0 %v149
    %491 = vmatprep.subr.mxu0 0.0
    %492 = vmatpush1.msra.mxu0 %v150
    %493 = vmatprep.subr.mxu0 0.0
    %494 = vmatpush1.msra.mxu0 0.0
    %495 = vmatprep.subr.mxu0 0.0
    %496 = vmatpush1.msra.mxu0 0.0
    %497 = vmatprep.subr.mxu0 0.0
    %498 = vmatpush1.msra.mxu0 0.0
    %499 = vmatprep.subr.mxu0 0.0
    %500 = vmatpush1.msra.mxu0 0.0
    %501 = vmatprep.subr.mxu0 0.0
    %502 = vmatpush1.msra.mxu0 0.0
    %503 = vmatprep.subr.mxu0 0.0
    %504 = vmatpush1.msra.mxu0 0.0
    %505 = vmatprep.subr.mxu0 0.0
    %506 = vmatpush1.msra.mxu0 0.0
    %507 = vmatprep.subr.mxu0 0.0
    %508 = vmatpush1.msra.mxu0 0.0
    %509 = vmatprep.subr.mxu0 0.0
    %510 = vmatpush1.msra.mxu0 0.0
    %511 = vmatprep.subr.mxu0 0.0
    %512 = vmatpush1.msra.mxu0 0.0
    %513 = vmatprep.subr.mxu0 0.0
    %514 = vmatpush1.msra.mxu0 0.0
    %515 = vmatprep.subr.mxu0 0.0
    %516 = vmatpush1.msra.mxu0 0.0
    %517 = vmatprep.subr.mxu0 0.0
    %518 = vmatpush1.msra.mxu0 0.0
    %519 = vmatprep.subr.mxu0 0.0
    %520 = vmatpush1.msra.mxu0 0.0
    %521 = vmatprep.subr.mxu0 0.0
    %522 = vmatpush1.msra.mxu0 0.0
    %523 = vmatprep.subr.mxu0 0.0
    %524 = vmatpush1.msra.mxu0 0.0
    %525 = vmatprep.mubr.f32.mxu0 0.0
    %526 = vmatmul.mubr.f32.gmra.mrb[0].mxu0 %v451
    %v527 = vpop.f32.mrb[0].mxu0
    %v528 = vadd.f32 0.0, %v527
    %v529 = vpop.f32.mrb[0].mxu0
    %530 = vdwg.mxu0
    %v531 = vadd.f32 %v460, %v528
    %v532 = vtanh.pop %v531
    %s533 = scalar_lea.vmem [#allocation3], 16
    %534 = vst.msk [vmem:[%s533] sm:$0xff] %vm123, %v532
    %s535 = scalar_lea.vmem [#allocation3], 40
    %536 = vst.msk [vmem:[%s535] sm:$0xff] %vm124, %v532
    %s537 = scalar_lea.vmem [#allocation2], 24
    %v538 = vld [vmem:[%s537] sm:$0xff]
    %s539 = scalar_lea.vmem [#allocation2], 32
    %v540 = vld [vmem:[%s539] sm:$0xff]
    %v541 = vsel %vm123, %v538, %v540
    %542 = vmatprep.subr.mxu0 0.0
    %543 = vmatpush1.msra.mxu0 %v135
    %544 = vmatprep.subr.mxu0 0.0
    %545 = vmatpush1.msra.mxu0 %v136
    %546 = vmatprep.subr.mxu0 0.0
    %547 = vmatpush1.msra.mxu0 %v137
    %548 = vmatprep.subr.mxu0 0.0
    %549 = vmatpush1.msra.mxu0 %v138
    %550 = vmatprep.subr.mxu0 0.0
    %551 = vmatpush1.msra.mxu0 %v139
    %552 = vmatprep.subr.mxu0 0.0
    %553 = vmatpush1.msra.mxu0 %v140
    %554 = vmatprep.subr.mxu0 0.0
    %555 = vmatpush1.msra.mxu0 %v141
    %556 = vmatprep.subr.mxu0 0.0
    %557 = vmatpush1.msra.mxu0 %v142
    %558 = vmatprep.subr.mxu0 0.0
    %559 = vmatpush1.msra.mxu0 %v143
    %560 = vmatprep.subr.mxu0 0.0
    %561 = vmatpush1.msra.mxu0 %v144
    %562 = vmatprep.subr.mxu0 0.0
    %563 = vmatpush1.msra.mxu0 %v145
    %564 = vmatprep.subr.mxu0 0.0
    %565 = vmatpush1.msra.mxu0 %v146
    %566 = vmatprep.subr.mxu0 0.0
    %567 = vmatpush1.msra.mxu0 %v147
    %568 = vmatprep.subr.mxu0 0.0
    %569 = vmatpush1.msra.mxu0 %v148
    %570 = vmatprep.subr.mxu0 0.0
    %571 = vmatpush1.msra.mxu0 %v149
    %572 = vmatprep.subr.mxu0 0.0
    %573 = vmatpush1.msra.mxu0 %v150
    %574 = vmatprep.subr.mxu0 0.0
    %575 = vmatpush1.msra.mxu0 0.0
    %576 = vmatprep.subr.mxu0 0.0
    %577 = vmatpush1.msra.mxu0 0.0
    %578 = vmatprep.subr.mxu0 0.0
    %579 = vmatpush1.msra.mxu0 0.0
    %580 = vmatprep.subr.mxu0 0.0
    %581 = vmatpush1.msra.mxu0 0.0
    %582 = vmatprep.subr.mxu0 0.0
    %583 = vmatpush1.msra.mxu0 0.0
    %584 = vmatprep.subr.mxu0 0.0
    %585 = vmatpush1.msra.mxu0 0.0
    %586 = vmatprep.subr.mxu0 0.0
    %587 = vmatpush1.msra.mxu0 0.0
    %588 = vmatprep.subr.mxu0 0.0
    %589 = vmatpush1.msra.mxu0 0.0
    %590 = vmatprep.subr.mxu0 0.0
    %591 = vmatpush1.msra.mxu0 0.0
    %592 = vmatprep.subr.mxu0 0.0
    %593 = vmatpush1.msra.mxu0 0.0
    %594 = vmatprep.subr.mxu0 0.0
    %595 = vmatpush1.msra.mxu0 0.0
    %596 = vmatprep.subr.mxu0 0.0
    %597 = vmatpush1.msra.mxu0 0.0
    %598 = vmatprep.subr.mxu0 0.0
    %599 = vmatpush1.msra.mxu0 0.0
    %600 = vmatprep.subr.mxu0 0.0
    %601 = vmatpush1.msra.mxu0 0.0
    %602 = vmatprep.subr.mxu0 0.0
    %603 = vmatpush1.msra.mxu0 0.0
    %604 = vmatprep.subr.mxu0 0.0
    %605 = vmatpush1.msra.mxu0 0.0
    %606 = vmatprep.mubr.f32.mxu0 0.0
    %607 = vmatmul.mubr.f32.gmra.mrb[0].mxu0 %v532
    %v608 = vpop.f32.mrb[0].mxu0
    %v609 = vadd.f32 0.0, %v608
    %v610 = vpop.f32.mrb[0].mxu0
    %611 = vdwg.mxu0
    %v612 = vadd.f32 %v541, %v609
    %v613 = vtanh.pop %v612
    %s614 = scalar_lea.vmem [#allocation3], 24
    %615 = vst.msk [vmem:[%s614] sm:$0xff] %vm123, %v613
    %s616 = scalar_lea.vmem [#allocation3], 32
    %617 = vst.msk [vmem:[%s616] sm:$0xff] %vm124, %v613
    %v618 = vld [vmem:[%s539] sm:$0xff]
    %v619 = vld [vmem:[%s537] sm:$0xff]
    %v620 = vsel %vm123, %v618, %v619
    %621 = vmatprep.subr.mxu0 0.0
    %622 = vmatpush1.msra.mxu0 %v135
    %623 = vmatprep.subr.mxu0 0.0
    %624 = vmatpush1.msra.mxu0 %v136
    %625 = vmatprep.subr.mxu0 0.0
    %626 = vmatpush1.msra.mxu0 %v137
    %627 = vmatprep.subr.mxu0 0.0
    %628 = vmatpush1.msra.mxu0 %v138
    %629 = vmatprep.subr.mxu0 0.0
    %630 = vmatpush1.msra.mxu0 %v139
    %631 = vmatprep.subr.mxu0 0.0
    %632 = vmatpush1.msra.mxu0 %v140
    %633 = vmatprep.subr.mxu0 0.0
    %634 = vmatpush1.msra.mxu0 %v141
    %635 = vmatprep.subr.mxu0 0.0
    %636 = vmatpush1.msra.mxu0 %v142
    %637 = vmatprep.subr.mxu0 0.0
    %638 = vmatpush1.msra.mxu0 %v143
    %639 = vmatprep.subr.mxu0 0.0
    %640 = vmatpush1.msra.mxu0 %v144
    %641 = vmatprep.subr.mxu0 0.0
    %642 = vmatpush1.msra.mxu0 %v145
    %643 = vmatprep.subr.mxu0 0.0
    %644 = vmatpush1.msra.mxu0 %v146
    %645 = vmatprep.subr.mxu0 0.0
    %646 = vmatpush1.msra.mxu0 %v147
    %647 = vmatprep.subr.mxu0 0.0
    %648 = vmatpush1.msra.mxu0 %v148
    %649 = vmatprep.subr.mxu0 0.0
    %650 = vmatpush1.msra.mxu0 %v149
    %651 = vmatprep.subr.mxu0 0.0
    %652 = vmatpush1.msra.mxu0 %v150
    %653 = vmatprep.subr.mxu0 0.0
    %654 = vmatpush1.msra.mxu0 0.0
    %655 = vmatprep.subr.mxu0 0.0
    %656 = vmatpush1.msra.mxu0 0.0
    %657 = vmatprep.subr.mxu0 0.0
    %658 = vmatpush1.msra.mxu0 0.0
    %659 = vmatprep.subr.mxu0 0.0
    %660 = vmatpush1.msra.mxu0 0.0
    %661 = vmatprep.subr.mxu0 0.0
    %662 = vmatpush1.msra.mxu0 0.0
    %663 = vmatprep.subr.mxu0 0.0
    %664 = vmatpush1.msra.mxu0 0.0
    %665 = vmatprep.subr.mxu0 0.0
    %666 = vmatpush1.msra.mxu0 0.0
    %667 = vmatprep.subr.mxu0 0.0
    %668 = vmatpush1.msra.mxu0 0.0
    %669 = vmatprep.subr.mxu0 0.0
    %670 = vmatpush1.msra.mxu0 0.0
    %671 = vmatprep.subr.mxu0 0.0
    %672 = vmatpush1.msra.mxu0 0.0
    %673 = vmatprep.subr.mxu0 0.0
    %674 = vmatpush1.msra.mxu0 0.0
    %675 = vmatprep.subr.mxu0 0.0
    %676 = vmatpush1.msra.mxu0 0.0
    %677 = vmatprep.subr.mxu0 0.0
    %678 = vmatpush1.msra.mxu0 0.0
    %679 = vmatprep.subr.mxu0 0.0
    %680 = vmatpush1.msra.mxu0 0.0
    %681 = vmatprep.subr.mxu0 0.0
    %682 = vmatpush1.msra.mxu0 0.0
    %683 = vmatprep.subr.mxu0 0.0
    %684 = vmatpush1.msra.mxu0 0.0
    %685 = vmatprep.mubr.f32.mxu0 0.0
    %686 = vmatmul.mubr.f32.gmra.mrb[0].mxu0 %v613
    %v687 = vpop.f32.mrb[0].mxu0
    %v688 = vadd.f32 0.0, %v687
    %v689 = vpop.f32.mrb[0].mxu0
    %690 = vdwg.mxu0
    %v691 = vadd.f32 %v620, %v688
    %v692 = vtanh.pop %v691
    %693 = vst.msk [vmem:[%s616] sm:$0xff] %vm123, %v692
    %694 = vst.msk [vmem:[%s614] sm:$0xff] %vm124, %v692
    %v695 = vld [vmem:[%s458] sm:$0xff]
    %v696 = vld [vmem:[%s456] sm:$0xff]
    %v697 = vsel %vm123, %v695, %v696
    %698 = vmatprep.subr.mxu0 0.0
    %699 = vmatpush1.msra.mxu0 %v135
    %700 = vmatprep.subr.mxu0 0.0
    %701 = vmatpush1.msra.mxu0 %v136
    %702 = vmatprep.subr.mxu0 0.0
    %703 = vmatpush1.msra.mxu0 %v137
    %704 = vmatprep.subr.mxu0 0.0
    %705 = vmatpush1.msra.mxu0 %v138
    %706 = vmatprep.subr.mxu0 0.0
    %707 = vmatpush1.msra.mxu0 %v139
    %708 = vmatprep.subr.mxu0 0.0
    %709 = vmatpush1.msra.mxu0 %v140
    %710 = vmatprep.subr.mxu0 0.0
    %711 = vmatpush1.msra.mxu0 %v141
    %712 = vmatprep.subr.mxu0 0.0
    %713 = vmatpush1.msra.mxu0 %v142
    %714 = vmatprep.subr.mxu0 0.0
    %715 = vmatpush1.msra.mxu0 %v143
    %716 = vmatprep.subr.mxu0 0.0
    %717 = vmatpush1.msra.mxu0 %v144
    %718 = vmatprep.subr.mxu0 0.0
    %719 = vmatpush1.msra.mxu0 %v145
    %720 = vmatprep.subr.mxu0 0.0
    %721 = vmatpush1.msra.mxu0 %v146
    %722 = vmatprep.subr.mxu0 0.0
    %723 = vmatpush1.msra.mxu0 %v147
    %724 = vmatprep.subr.mxu0 0.0
    %725 = vmatpush1.msra.mxu0 %v148
    %726 = vmatprep.subr.mxu0 0.0
    %727 = vmatpush1.msra.mxu0 %v149
    %728 = vmatprep.subr.mxu0 0.0
    %729 = vmatpush1.msra.mxu0 %v150
    %730 = vmatprep.subr.mxu0 0.0
    %731 = vmatpush1.msra.mxu0 0.0
    %732 = vmatprep.subr.mxu0 0.0
    %733 = vmatpush1.msra.mxu0 0.0
    %734 = vmatprep.subr.mxu0 0.0
    %735 = vmatpush1.msra.mxu0 0.0
    %736 = vmatprep.subr.mxu0 0.0
    %737 = vmatpush1.msra.mxu0 0.0
    %738 = vmatprep.subr.mxu0 0.0
    %739 = vmatpush1.msra.mxu0 0.0
    %740 = vmatprep.subr.mxu0 0.0
    %741 = vmatpush1.msra.mxu0 0.0
    %742 = vmatprep.subr.mxu0 0.0
    %743 = vmatpush1.msra.mxu0 0.0
    %744 = vmatprep.subr.mxu0 0.0
    %745 = vmatpush1.msra.mxu0 0.0
    %746 = vmatprep.subr.mxu0 0.0
    %747 = vmatpush1.msra.mxu0 0.0
    %748 = vmatprep.subr.mxu0 0.0
    %749 = vmatpush1.msra.mxu0 0.0
    %750 = vmatprep.subr.mxu0 0.0
    %751 = vmatpush1.msra.mxu0 0.0
    %752 = vmatprep.subr.mxu0 0.0
    %753 = vmatpush1.msra.mxu0 0.0
    %754 = vmatprep.subr.mxu0 0.0
    %755 = vmatpush1.msra.mxu0 0.0
    %756 = vmatprep.subr.mxu0 0.0
    %757 = vmatpush1.msra.mxu0 0.0
    %758 = vmatprep.subr.mxu0 0.0
    %759 = vmatpush1.msra.mxu0 0.0
    %760 = vmatprep.subr.mxu0 0.0
    %761 = vmatpush1.msra.mxu0 0.0
    %762 = vmatprep.mubr.f32.mxu0 0.0
    %763 = vmatmul.mubr.f32.gmra.mrb[0].mxu0 %v692
    %v764 = vpop.f32.mrb[0].mxu0
    %v765 = vadd.f32 0.0, %v764
    %v766 = vpop.f32.mrb[0].mxu0
    %767 = vdwg.mxu0
    %v768 = vadd.f32 %v697, %v765
    %v769 = vtanh.pop %v768
    %770 = vst.msk [vmem:[%s535] sm:$0xff] %vm123, %v769
    %771 = vst.msk [vmem:[%s533] sm:$0xff] %vm124, %v769
    %v772 = vld [vmem:[%s377] sm:$0xff]
    %v773 = vld [vmem:[%s375] sm:$0xff]
    %v774 = vsel %vm123, %v772, %v773
    %775 = vmatprep.subr.mxu0 0.0
    %776 = vmatpush1.msra.mxu0 %v135
    %777 = vmatprep.subr.mxu0 0.0
    %778 = vmatpush1.msra.mxu0 %v136
    %779 = vmatprep.subr.mxu0 0.0
    %780 = vmatpush1.msra.mxu0 %v137
    %781 = vmatprep.subr.mxu0 0.0
    %782 = vmatpush1.msra.mxu0 %v138
    %783 = vmatprep.subr.mxu0 0.0
    %784 = vmatpush1.msra.mxu0 %v139
    %785 = vmatprep.subr.mxu0 0.0
    %786 = vmatpush1.msra.mxu0 %v140
    %787 = vmatprep.subr.mxu0 0.0
    %788 = vmatpush1.msra.mxu0 %v141
    %789 = vmatprep.subr.mxu0 0.0
    %790 = vmatpush1.msra.mxu0 %v142
    %791 = vmatprep.subr.mxu0 0.0
    %792 = vmatpush1.msra.mxu0 %v143
    %793 = vmatprep.subr.mxu0 0.0
    %794 = vmatpush1.msra.mxu0 %v144
    %795 = vmatprep.subr.mxu0 0.0
    %796 = vmatpush1.msra.mxu0 %v145
    %797 = vmatprep.subr.mxu0 0.0
    %798 = vmatpush1.msra.mxu0 %v146
    %799 = vmatprep.subr.mxu0 0.0
    %800 = vmatpush1.msra.mxu0 %v147
    %801 = vmatprep.subr.mxu0 0.0
    %802 = vmatpush1.msra.mxu0 %v148
    %803 = vmatprep.subr.mxu0 0.0
    %804 = vmatpush1.msra.mxu0 %v149
    %805 = vmatprep.subr.mxu0 0.0
    %806 = vmatpush1.msra.mxu0 %v150
    %807 = vmatprep.subr.mxu0 0.0
    %808 = vmatpush1.msra.mxu0 0.0
    %809 = vmatprep.subr.mxu0 0.0
    %810 = vmatpush1.msra.mxu0 0.0
    %811 = vmatprep.subr.mxu0 0.0
    %812 = vmatpush1.msra.mxu0 0.0
    %813 = vmatprep.subr.mxu0 0.0
    %814 = vmatpush1.msra.mxu0 0.0
    %815 = vmatprep.subr.mxu0 0.0
    %816 = vmatpush1.msra.mxu0 0.0
    %817 = vmatprep.subr.mxu0 0.0
    %818 = vmatpush1.msra.mxu0 0.0
    %819 = vmatprep.subr.mxu0 0.0
    %820 = vmatpush1.msra.mxu0 0.0
    %821 = vmatprep.subr.mxu0 0.0
    %822 = vmatpush1.msra.mxu0 0.0
    %823 = vmatprep.subr.mxu0 0.0
    %824 = vmatpush1.msra.mxu0 0.0
    %825 = vmatprep.subr.mxu0 0.0
    %826 = vmatpush1.msra.mxu0 0.0
    %827 = vmatprep.subr.mxu0 0.0
    %828 = vmatpush1.msra.mxu0 0.0
    %829 = vmatprep.subr.mxu0 0.0
    %830 = vmatpush1.msra.mxu0 0.0
    %831 = vmatprep.subr.mxu0 0.0
    %832 = vmatpush1.msra.mxu0 0.0
    %833 = vmatprep.subr.mxu0 0.0
    %834 = vmatpush1.msra.mxu0 0.0
    %835 = vmatprep.subr.mxu0 0.0
    %836 = vmatpush1.msra.mxu0 0.0
    %837 = vmatprep.subr.mxu0 0.0
    %838 = vmatpush1.msra.mxu0 0.0
    %839 = vmatprep.mubr.f32.mxu0 0.0
    %840 = vmatmul.mubr.f32.gmra.mrb[0].mxu0 %v769
    %v841 = vpop.f32.mrb[0].mxu0
    %v842 = vadd.f32 0.0, %v841
    %v843 = vpop.f32.mrb[0].mxu0
    %844 = vdwg.mxu0
    %v845 = vadd.f32 %v774, %v842
    %v846 = vtanh.pop %v845
    %847 = vst.msk [vmem:[%s454] sm:$0xff] %vm123, %v846
    %848 = vst.msk [vmem:[%s452] sm:$0xff] %vm124, %v846
    %v849 = vld [vmem:[%s297] sm:$0xff]
    %v850 = vld [vmem:[#allocation2] sm:$0xff]
    %v851 = vsel %vm123, %v849, %v850
    %852 = vmatprep.subr.mxu0 0.0
    %853 = vmatpush1.msra.mxu0 %v135
    %854 = vmatprep.subr.mxu0 0.0
    %855 = vmatpush1.msra.mxu0 %v136
    %856 = vmatprep.subr.mxu0 0.0
    %857 = vmatpush1.msra.mxu0 %v137
    %858 = vmatprep.subr.mxu0 0.0
    %859 = vmatpush1.msra.mxu0 %v138
    %860 = vmatprep.subr.mxu0 0.0
    %861 = vmatpush1.msra.mxu0 %v139
    %862 = vmatprep.subr.mxu0 0.0
    %863 = vmatpush1.msra.mxu0 %v140
    %864 = vmatprep.subr.mxu0 0.0
    %865 = vmatpush1.msra.mxu0 %v141
    %866 = vmatprep.subr.mxu0 0.0
    %867 = vmatpush1.msra.mxu0 %v142
    %868 = vmatprep.subr.mxu0 0.0
    %869 = vmatpush1.msra.mxu0 %v143
    %870 = vmatprep.subr.mxu0 0.0
    %871 = vmatpush1.msra.mxu0 %v144
    %872 = vmatprep.subr.mxu0 0.0
    %873 = vmatpush1.msra.mxu0 %v145
    %874 = vmatprep.subr.mxu0 0.0
    %875 = vmatpush1.msra.mxu0 %v146
    %876 = vmatprep.subr.mxu0 0.0
    %877 = vmatpush1.msra.mxu0 %v147
    %878 = vmatprep.subr.mxu0 0.0
    %879 = vmatpush1.msra.mxu0 %v148
    %880 = vmatprep.subr.mxu0 0.0
    %881 = vmatpush1.msra.mxu0 %v149
    %882 = vmatprep.subr.mxu0 0.0
    %883 = vmatpush1.msra.mxu0 %v150
    %884 = vmatprep.subr.mxu0 0.0
    %885 = vmatpush1.msra.mxu0 0.0
    %886 = vmatprep.subr.mxu0 0.0
    %887 = vmatpush1.msra.mxu0 0.0
    %888 = vmatprep.subr.mxu0 0.0
    %889 = vmatpush1.msra.mxu0 0.0
    %890 = vmatprep.subr.mxu0 0.0
    %891 = vmatpush1.msra.mxu0 0.0
    %892 = vmatprep.subr.mxu0 0.0
    %893 = vmatpush1.msra.mxu0 0.0
    %894 = vmatprep.subr.mxu0 0.0
    %895 = vmatpush1.msra.mxu0 0.0
    %896 = vmatprep.subr.mxu0 0.0
    %897 = vmatpush1.msra.mxu0 0.0
    %898 = vmatprep.subr.mxu0 0.0
    %899 = vmatpush1.msra.mxu0 0.0
    %900 = vmatprep.subr.mxu0 0.0
    %901 = vmatpush1.msra.mxu0 0.0
    %902 = vmatprep.subr.mxu0 0.0
    %903 = vmatpush1.msra.mxu0 0.0
    %904 = vmatprep.subr.mxu0 0.0
    %905 = vmatpush1.msra.mxu0 0.0
    %906 = vmatprep.subr.mxu0 0.0
    %907 = vmatpush1.msra.mxu0 0.0
    %908 = vmatprep.subr.mxu0 0.0
    %909 = vmatpush1.msra.mxu0 0.0
    %910 = vmatprep.subr.mxu0 0.0
    %911 = vmatpush1.msra.mxu0 0.0
    %912 = vmatprep.subr.mxu0 0.0
    %913 = vmatpush1.msra.mxu0 0.0
    %914 = vmatprep.subr.mxu0 0.0
    %915 = vmatpush1.msra.mxu0 0.0
    %916 = vmatprep.mubr.f32.mxu0 0.0
    %917 = vmatmul.mubr.f32.gmra.mrb[0].mxu0 %v846
    %v918 = vpop.f32.mrb[0].mxu0
    %v919 = vadd.f32 0.0, %v918
    %v920 = vpop.f32.mrb[0].mxu0
    %921 = vdwg.mxu0
    %v922 = vadd.f32 %v851, %v919
    %v923 = vtanh.pop %v922
    %924 = vst.msk [vmem:[%s373] sm:$0xff] %vm123, %v923
    %925 = vst.msk [vmem:[#allocation3] sm:$0xff] %vm124, %v923
    %v926 = vld [vmem:[#allocation3] sm:$0xff]
    %v927 = vld [vmem:[#allocation3 + $0x8] sm:$0xff]
    %v928 = vld [vmem:[#allocation3 + $0x10] sm:$0xff]
    %v929 = vld [vmem:[#allocation3 + $0x18] sm:$0xff]
    %v930 = vld [vmem:[#allocation3 + $0x20] sm:$0xff]
    %v931 = vld [vmem:[#allocation3 + $0x28] sm:$0xff]
    %v932 = vld [vmem:[#allocation3 + $0x30] sm:$0xff]
    %v933 = vld [vmem:[#allocation3 + $0x38] sm:$0xff]
    %v934 = vld [vmem:[#allocation8] sm:$0xff]
    %v935 = vld [vmem:[#allocation8 + $0x8] sm:$0xff]
    %v936 = vld [vmem:[#allocation8 + $0x10] sm:$0xff]
    %v937 = vld [vmem:[#allocation8 + $0x18] sm:$0xff]
    %v938 = vld [vmem:[#allocation8 + $0x20] sm:$0xff]
    %v939 = vld [vmem:[#allocation8 + $0x28] sm:$0xff]
    %v940 = vld [vmem:[#allocation8 + $0x30] sm:$0xff]
    %v941 = vld [vmem:[#allocation8 + $0x38] sm:$0xff]
    %v942 = vld [vmem:[#allocation8 + $0x40] sm:$0xff]
    %v943 = vld [vmem:[#allocation8 + $0x48] sm:$0xff]
    %v944 = vld [vmem:[#allocation8 + $0x50] sm:$0xff]
    %v945 = vld [vmem:[#allocation8 + $0x58] sm:$0xff]
    %v946 = vld [vmem:[#allocation8 + $0x60] sm:$0xff]
    %v947 = vld [vmem:[#allocation8 + $0x68] sm:$0xff]
    %v948 = vld [vmem:[#allocation8 + $0x70] sm:$0xff]
    %v949 = vld [vmem:[#allocation8 + $0x78] sm:$0xff]
    %v950 = vld [vmem:[#allocation9] sm:$0xff]
    %v951 = vld [vmem:[#allocation9 + $0x8] sm:$0xff]
    %v952 = vld [vmem:[#allocation9 + $0x10] sm:$0xff]
    %v953 = vld [vmem:[#allocation9 + $0x18] sm:$0xff]
    %v954 = vld [vmem:[#allocation9 + $0x20] sm:$0xff]
    %v955 = vld [vmem:[#allocation9 + $0x28] sm:$0xff]
    %v956 = vld [vmem:[#allocation9 + $0x30] sm:$0xff]
    %v957 = vld [vmem:[#allocation9 + $0x38] sm:$0xff]
    %v958 = vld [vmem:[#allocation9 + $0x40] sm:$0xff]
    %v959 = vld [vmem:[#allocation9 + $0x48] sm:$0xff]
    %v960 = vld [vmem:[#allocation9 + $0x50] sm:$0xff]
    %v961 = vld [vmem:[#allocation9 + $0x58] sm:$0xff]
    %v962 = vld [vmem:[#allocation9 + $0x60] sm:$0xff]
    %v963 = vld [vmem:[#allocation9 + $0x68] sm:$0xff]
    %v964 = vld [vmem:[#allocation9 + $0x70] sm:$0xff]
    %v965 = vld [vmem:[#allocation9 + $0x78] sm:$0xff]
    %v966 = vld [vmem:[#allocation11] sm:$0x1]
    %v968 = vlaneseq
    %v969 = vshrl.u32 %v968, 7
    %v970 = vsub.s32 0, %v969
    %v971 = vrot.slane %v966, %v970
    %973 = vmatprep.subr.mxu0 0.0
    %974 = vmatpush1.msra.mxu0 %v934
    %975 = vmatprep.subr.mxu0 0.0
    %976 = vmatpush1.msra.mxu0 %v935
    %977 = vmatprep.subr.mxu0 0.0
    %978 = vmatpush1.msra.mxu0 %v936
    %979 = vmatprep.subr.mxu0 0.0
    %980 = vmatpush1.msra.mxu0 %v937
    %981 = vmatprep.subr.mxu0 0.0
    %982 = vmatpush1.msra.mxu0 %v938
    %983 = vmatprep.subr.mxu0 0.0
    %984 = vmatpush1.msra.mxu0 %v939
    %985 = vmatprep.subr.mxu0 0.0
    %986 = vmatpush1.msra.mxu0 %v940
    %987 = vmatprep.subr.mxu0 0.0
    %988 = vmatpush1.msra.mxu0 %v941
    %989 = vmatprep.subr.mxu0 0.0
    %990 = vmatpush1.msra.mxu0 %v942
    %991 = vmatprep.subr.mxu0 0.0
    %992 = vmatpush1.msra.mxu0 %v943
    %993 = vmatprep.subr.mxu0 0.0
    %994 = vmatpush1.msra.mxu0 %v944
    %995 = vmatprep.subr.mxu0 0.0
    %996 = vmatpush1.msra.mxu0 %v945
    %997 = vmatprep.subr.mxu0 0.0
    %998 = vmatpush1.msra.mxu0 %v946
    %999 = vmatprep.subr.mxu0 0.0
    %1000 = vmatpush1.msra.mxu0 %v947
    %1001 = vmatprep.subr.mxu0 0.0
    %1002 = vmatpush1.msra.mxu0 %v948
    %1003 = vmatprep.subr.mxu0 0.0
    %1004 = vmatpush1.msra.mxu0 %v949
    %1005 = vmatprep.subr.mxu0 0.0
    %1006 = vmatpush1.msra.mxu0 0.0
    %1007 = vmatprep.subr.mxu0 0.0
    %1008 = vmatpush1.msra.mxu0 0.0
    %1009 = vmatprep.subr.mxu0 0.0
    %1010 = vmatpush1.msra.mxu0 0.0
    %1011 = vmatprep.subr.mxu0 0.0
    %1012 = vmatpush1.msra.mxu0 0.0
    %1013 = vmatprep.subr.mxu0 0.0
    %1014 = vmatpush1.msra.mxu0 0.0
    %1015 = vmatprep.subr.mxu0 0.0
    %1016 = vmatpush1.msra.mxu0 0.0
    %1017 = vmatprep.subr.mxu0 0.0
    %1018 = vmatpush1.msra.mxu0 0.0
    %1019 = vmatprep.subr.mxu0 0.0
    %1020 = vmatpush1.msra.mxu0 0.0
    %1021 = vmatprep.subr.mxu0 0.0
    %1022 = vmatpush1.msra.mxu0 0.0
    %1023 = vmatprep.subr.mxu0 0.0
    %1024 = vmatpush1.msra.mxu0 0.0
    %1025 = vmatprep.subr.mxu0 0.0
    %1026 = vmatpush1.msra.mxu0 0.0
    %1027 = vmatprep.subr.mxu0 0.0
    %1028 = vmatpush1.msra.mxu0 0.0
    %1029 = vmatprep.subr.mxu0 0.0
    %1030 = vmatpush1.msra.mxu0 0.0
    %1031 = vmatprep.subr.mxu0 0.0
    %1032 = vmatpush1.msra.mxu0 0.0
    %1033 = vmatprep.subr.mxu0 0.0
    %1034 = vmatpush1.msra.mxu0 0.0
    %1035 = vmatprep.subr.mxu0 0.0
    %1036 = vmatpush1.msra.mxu0 0.0
    %1037 = vmatprep.mubr.f32.mxu0 0.0
    %1038 = vmatmul.mubr.f32.gmra.mrb[0].mxu0 %v926
    %v1039 = vpop.f32.mrb[0].mxu0
    %v1040 = vadd.f32 %v971, %v1039
    %v1041 = vpop.f32.mrb[0].mxu0
    %1042 = vmatprep.mubr.f32.mxu0 0.0
    %1043 = vmatmul.mubr.f32.gmra.mrb[0].mxu0 %v927
    %v1044 = vpop.f32.mrb[0].mxu0
    %v1045 = vadd.f32 %v971, %v1044
    %v1046 = vpop.f32.mrb[0].mxu0
    %1047 = vmatprep.mubr.f32.mxu0 0.0
    %1048 = vmatmul.mubr.f32.gmra.mrb[0].mxu0 %v928
    %v1049 = vpop.f32.mrb[0].mxu0
    %v1050 = vadd.f32 %v971, %v1049
    %v1051 = vpop.f32.mrb[0].mxu0
    %1052 = vmatprep.mubr.f32.mxu0 0.0
    %1053 = vmatmul.mubr.f32.gmra.mrb[0].mxu0 %v929
    %v1054 = vpop.f32.mrb[0].mxu0
    %v1055 = vadd.f32 %v971, %v1054
    %v1056 = vpop.f32.mrb[0].mxu0
    %1057 = vmatprep.mubr.f32.mxu0 0.0
    %1058 = vmatmul.mubr.f32.gmra.mrb[0].mxu0 %v930
    %v1059 = vpop.f32.mrb[0].mxu0
    %v1060 = vadd.f32 %v971, %v1059
    %v1061 = vpop.f32.mrb[0].mxu0
    %1062 = vmatprep.mubr.f32.mxu0 0.0
    %1063 = vmatmul.mubr.f32.gmra.mrb[0].mxu0 %v931
    %v1064 = vpop.f32.mrb[0].mxu0
    %v1065 = vadd.f32 %v971, %v1064
    %v1066 = vpop.f32.mrb[0].mxu0
    %1067 = vmatprep.mubr.f32.mxu0 0.0
    %1068 = vmatmul.mubr.f32.gmra.mrb[0].mxu0 %v932
    %v1069 = vpop.f32.mrb[0].mxu0
    %v1070 = vadd.f32 %v971, %v1069
    %v1071 = vpop.f32.mrb[0].mxu0
    %1072 = vmatprep.mubr.f32.mxu0 0.0
    %1073 = vmatmul.mubr.f32.gmra.mrb[0].mxu0 %v933
    %v1074 = vpop.f32.mrb[0].mxu0
    %v1075 = vadd.f32 %v971, %v1074
    %v1076 = vpop.f32.mrb[0].mxu0
    %1077 = vdwg.mxu0
    %1078 = vst [vmem:[#allocation2] sm:$0xff] %v1040
    %1079 = vst [vmem:[#allocation2 + $0x8] sm:$0xff] %v1045
    %1080 = vst [vmem:[#allocation2 + $0x10] sm:$0xff] %v1050
    %1081 = vst [vmem:[#allocation2 + $0x18] sm:$0xff] %v1055
    %1082 = vst [vmem:[#allocation2 + $0x20] sm:$0xff] %v1060
    %1083 = vst [vmem:[#allocation2 + $0x28] sm:$0xff] %v1065
    %1084 = vst [vmem:[#allocation2 + $0x30] sm:$0xff] %v1070
    %1085 = vst [vmem:[#allocation2 + $0x38] sm:$0xff] %v1075
    %v1086 = vld [vmem:[#allocation2] sm:$0xff]
    %v1087 = vld [vmem:[%s297] sm:$0xff]
    %v1088 = vsel %vm123, %v1086, %v1087
    %1089 = vmatprep.subr.mxu0 0.0
    %1090 = vmatpush1.msra.mxu0 %v950
    %1091 = vmatprep.subr.mxu0 0.0
    %1092 = vmatpush1.msra.mxu0 %v951
    %1093 = vmatprep.subr.mxu0 0.0
    %1094 = vmatpush1.msra.mxu0 %v952
    %1095 = vmatprep.subr.mxu0 0.0
    %1096 = vmatpush1.msra.mxu0 %v953
    %1097 = vmatprep.subr.mxu0 0.0
    %1098 = vmatpush1.msra.mxu0 %v954
    %1099 = vmatprep.subr.mxu0 0.0
    %1100 = vmatpush1.msra.mxu0 %v955
    %1101 = vmatprep.subr.mxu0 0.0
    %1102 = vmatpush1.msra.mxu0 %v956
    %1103 = vmatprep.subr.mxu0 0.0
    %1104 = vmatpush1.msra.mxu0 %v957
    %1105 = vmatprep.subr.mxu0 0.0
    %1106 = vmatpush1.msra.mxu0 %v958
    %1107 = vmatprep.subr.mxu0 0.0
    %1108 = vmatpush1.msra.mxu0 %v959
    %1109 = vmatprep.subr.mxu0 0.0
    %1110 = vmatpush1.msra.mxu0 %v960
    %1111 = vmatprep.subr.mxu0 0.0
    %1112 = vmatpush1.msra.mxu0 %v961
    %1113 = vmatprep.subr.mxu0 0.0
    %1114 = vmatpush1.msra.mxu0 %v962
    %1115 = vmatprep.subr.mxu0 0.0
    %1116 = vmatpush1.msra.mxu0 %v963
    %1117 = vmatprep.subr.mxu0 0.0
    %1118 = vmatpush1.msra.mxu0 %v964
    %1119 = vmatprep.subr.mxu0 0.0
    %1120 = vmatpush1.msra.mxu0 %v965
    %1121 = vmatprep.subr.mxu0 0.0
    %1122 = vmatpush1.msra.mxu0 0.0
    %1123 = vmatprep.subr.mxu0 0.0
    %1124 = vmatpush1.msra.mxu0 0.0
    %1125 = vmatprep.subr.mxu0 0.0
    %1126 = vmatpush1.msra.mxu0 0.0
    %1127 = vmatprep.subr.mxu0 0.0
    %1128 = vmatpush1.msra.mxu0 0.0
    %1129 = vmatprep.subr.mxu0 0.0
    %1130 = vmatpush1.msra.mxu0 0.0
    %1131 = vmatprep.subr.mxu0 0.0
    %1132 = vmatpush1.msra.mxu0 0.0
    %1133 = vmatprep.subr.mxu0 0.0
    %1134 = vmatpush1.msra.mxu0 0.0
    %1135 = vmatprep.subr.mxu0 0.0
    %1136 = vmatpush1.msra.mxu0 0.0
    %1137 = vmatprep.subr.mxu0 0.0
    %1138 = vmatpush1.msra.mxu0 0.0
    %1139 = vmatprep.subr.mxu0 0.0
    %1140 = vmatpush1.msra.mxu0 0.0
    %1141 = vmatprep.subr.mxu0 0.0
    %1142 = vmatpush1.msra.mxu0 0.0
    %1143 = vmatprep.subr.mxu0 0.0
    %1144 = vmatpush1.msra.mxu0 0.0
    %1145 = vmatprep.subr.mxu0 0.0
    %1146 = vmatpush1.msra.mxu0 0.0
    %1147 = vmatprep.subr.mxu0 0.0
    %1148 = vmatpush1.msra.mxu0 0.0
    %1149 = vmatprep.subr.mxu0 0.0
    %1150 = vmatpush1.msra.mxu0 0.0
    %1151 = vmatprep.subr.mxu0 0.0
    %1152 = vmatpush1.msra.mxu0 0.0
    %1153 = vmatprep.mubr.f32.mxu0 0.0
    %1154 = vmatmul.mubr.f32.gmra.mrb[0].mxu0 0.0
    %v1155 = vpop.f32.mrb[0].mxu0
    %v1156 = vadd.f32 0.0, %v1155
    %v1157 = vpop.f32.mrb[0].mxu0
    %1158 = vdwg.mxu0
    %v1159 = vadd.f32 %v1088, %v1156
    %v1160 = vtanh.pop %v1159
    %1161 = vst.msk [vmem:[#allocation3] sm:$0xff] %vm123, %v1160
    %1162 = vst.msk [vmem:[%s373] sm:$0xff] %vm124, %v1160
    %v1163 = vld [vmem:[%s375] sm:$0xff]
    %v1164 = vld [vmem:[%s377] sm:$0xff]
    %v1165 = vsel %vm123, %v1163, %v1164
    %1166 = vmatprep.subr.mxu0 0.0
    %1167 = vmatpush1.msra.mxu0 %v950
    %1168 = vmatprep.subr.mxu0 0.0
    %1169 = vmatpush1.msra.mxu0 %v951
    %1170 = vmatprep.subr.mxu0 0.0
    %1171 = vmatpush1.msra.mxu0 %v952
    %1172 = vmatprep.subr.mxu0 0.0
    %1173 = vmatpush1.msra.mxu0 %v953
    %1174 = vmatprep.subr.mxu0 0.0
    %1175 = vmatpush1.msra.mxu0 %v954
    %1176 = vmatprep.subr.mxu0 0.0
    %1177 = vmatpush1.msra.mxu0 %v955
    %1178 = vmatprep.subr.mxu0 0.0
    %1179 = vmatpush1.msra.mxu0 %v956
    %1180 = vmatprep.subr.mxu0 0.0
    %1181 = vmatpush1.msra.mxu0 %v957
    %1182 = vmatprep.subr.mxu0 0.0
    %1183 = vmatpush1.msra.mxu0 %v958
    %1184 = vmatprep.subr.mxu0 0.0
    %1185 = vmatpush1.msra.mxu0 %v959
    %1186 = vmatprep.subr.mxu0 0.0
    %1187 = vmatpush1.msra.mxu0 %v960
    %1188 = vmatprep.subr.mxu0 0.0
    %1189 = vmatpush1.msra.mxu0 %v961
    %1190 = vmatprep.subr.mxu0 0.0
    %1191 = vmatpush1.msra.mxu0 %v962
    %1192 = vmatprep.subr.mxu0 0.0
    %1193 = vmatpush1.msra.mxu0 %v963
    %1194 = vmatprep.subr.mxu0 0.0
    %1195 = vmatpush1.msra.mxu0 %v964
    %1196 = vmatprep.subr.mxu0 0.0
    %1197 = vmatpush1.msra.mxu0 %v965
    %1198 = vmatprep.subr.mxu0 0.0
    %1199 = vmatpush1.msra.mxu0 0.0
    %1200 = vmatprep.subr.mxu0 0.0
    %1201 = vmatpush1.msra.mxu0 0.0
    %1202 = vmatprep.subr.mxu0 0.0
    %1203 = vmatpush1.msra.mxu0 0.0
    %1204 = vmatprep.subr.mxu0 0.0
    %1205 = vmatpush1.msra.mxu0 0.0
    %1206 = vmatprep.subr.mxu0 0.0
    %1207 = vmatpush1.msra.mxu0 0.0
    %1208 = vmatprep.subr.mxu0 0.0
    %1209 = vmatpush1.msra.mxu0 0.0
    %1210 = vmatprep.subr.mxu0 0.0
    %1211 = vmatpush1.msra.mxu0 0.0
    %1212 = vmatprep.subr.mxu0 0.0
    %1213 = vmatpush1.msra.mxu0 0.0
    %1214 = vmatprep.subr.mxu0 0.0
    %1215 = vmatpush1.msra.mxu0 0.0
    %1216 = vmatprep.subr.mxu0 0.0
    %1217 = vmatpush1.msra.mxu0 0.0
    %1218 = vmatprep.subr.mxu0 0.0
    %1219 = vmatpush1.msra.mxu0 0.0
    %1220 = vmatprep.subr.mxu0 0.0
    %1221 = vmatpush1.msra.mxu0 0.0
    %1222 = vmatprep.subr.mxu0 0.0
    %1223 = vmatpush1.msra.mxu0 0.0
    %1224 = vmatprep.subr.mxu0 0.0
    %1225 = vmatpush1.msra.mxu0 0.0
    %1226 = vmatprep.subr.mxu0 0.0
    %1227 = vmatpush1.msra.mxu0 0.0
    %1228 = vmatprep.subr.mxu0 0.0
    %1229 = vmatpush1.msra.mxu0 0.0
    %1230 = vmatprep.mubr.f32.mxu0 0.0
    %1231 = vmatmul.mubr.f32.gmra.mrb[0].mxu0 %v1160
    %v1232 = vpop.f32.mrb[0].mxu0
    %v1233 = vadd.f32 0.0, %v1232
    %v1234 = vpop.f32.mrb[0].mxu0
    %1235 = vdwg.mxu0
    %v1236 = vadd.f32 %v1165, %v1233
    %v1237 = vtanh.pop %v1236
    %1238 = vst.msk [vmem:[%s452] sm:$0xff] %vm123, %v1237
    %1239 = vst.msk [vmem:[%s454] sm:$0xff] %vm124, %v1237
    %v1240 = vld [vmem:[%s456] sm:$0xff]
    %v1241 = vld [vmem:[%s458] sm:$0xff]
    %v1242 = vsel %vm123, %v1240, %v1241
    %1243 = vmatprep.subr.mxu0 0.0
    %1244 = vmatpush1.msra.mxu0 %v950
    %1245 = vmatprep.subr.mxu0 0.0
    %1246 = vmatpush1.msra.mxu0 %v951
    %1247 = vmatprep.subr.mxu0 0.0
    %1248 = vmatpush1.msra.mxu0 %v952
    %1249 = vmatprep.subr.mxu0 0.0
    %1250 = vmatpush1.msra.mxu0 %v953
    %1251 = vmatprep.subr.mxu0 0.0
    %1252 = vmatpush1.msra.mxu0 %v954
    %1253 = vmatprep.subr.mxu0 0.0
    %1254 = vmatpush1.msra.mxu0 %v955
    %1255 = vmatprep.subr.mxu0 0.0
    %1256 = vmatpush1.msra.mxu0 %v956
    %1257 = vmatprep.subr.mxu0 0.0
    %1258 = vmatpush1.msra.mxu0 %v957
    %1259 = vmatprep.subr.mxu0 0.0
    %1260 = vmatpush1.msra.mxu0 %v958
    %1261 = vmatprep.subr.mxu0 0.0
    %1262 = vmatpush1.msra.mxu0 %v959
    %1263 = vmatprep.subr.mxu0 0.0
    %1264 = vmatpush1.msra.mxu0 %v960
    %1265 = vmatprep.subr.mxu0 0.0
    %1266 = vmatpush1.msra.mxu0 %v961
    %1267 = vmatprep.subr.mxu0 0.0
    %1268 = vmatpush1.msra.mxu0 %v962
    %1269 = vmatprep.subr.mxu0 0.0
    %1270 = vmatpush1.msra.mxu0 %v963
    %1271 = vmatprep.subr.mxu0 0.0
    %1272 = vmatpush1.msra.mxu0 %v964
    %1273 = vmatprep.subr.mxu0 0.0
    %1274 = vmatpush1.msra.mxu0 %v965
    %1275 = vmatprep.subr.mxu0 0.0
    %1276 = vmatpush1.msra.mxu0 0.0
    %1277 = vmatprep.subr.mxu0 0.0
    %1278 = vmatpush1.msra.mxu0 0.0
    %1279 = vmatprep.subr.mxu0 0.0
    %1280 = vmatpush1.msra.mxu0 0.0
    %1281 = vmatprep.subr.mxu0 0.0
    %1282 = vmatpush1.msra.mxu0 0.0
    %1283 = vmatprep.subr.mxu0 0.0
    %1284 = vmatpush1.msra.mxu0 0.0
    %1285 = vmatprep.subr.mxu0 0.0
    %1286 = vmatpush1.msra.mxu0 0.0
    %1287 = vmatprep.subr.mxu0 0.0
    %1288 = vmatpush1.msra.mxu0 0.0
    %1289 = vmatprep.subr.mxu0 0.0
    %1290 = vmatpush1.msra.mxu0 0.0
    %1291 = vmatprep.subr.mxu0 0.0
    %1292 = vmatpush1.msra.mxu0 0.0
    %1293 = vmatprep.subr.mxu0 0.0
    %1294 = vmatpush1.msra.mxu0 0.0
    %1295 = vmatprep.subr.mxu0 0.0
    %1296 = vmatpush1.msra.mxu0 0.0
    %1297 = vmatprep.subr.mxu0 0.0
    %1298 = vmatpush1.msra.mxu0 0.0
    %1299 = vmatprep.subr.mxu0 0.0
    %1300 = vmatpush1.msra.mxu0 0.0
    %1301 = vmatprep.subr.mxu0 0.0
    %1302 = vmatpush1.msra.mxu0 0.0
    %1303 = vmatprep.subr.mxu0 0.0
    %1304 = vmatpush1.msra.mxu0 0.0
    %1305 = vmatprep.subr.mxu0 0.0
    %1306 = vmatpush1.msra.mxu0 0.0
    %1307 = vmatprep.mubr.f32.mxu0 0.0
    %1308 = vmatmul.mubr.f32.gmra.mrb[0].mxu0 %v1237
    %v1309 = vpop.f32.mrb[0].mxu0
    %v1310 = vadd.f32 0.0, %v1309
    %v1311 = vpop.f32.mrb[0].mxu0
    %1312 = vdwg.mxu0
    %v1313 = vadd.f32 %v1242, %v1310
    %v1314 = vtanh.pop %v1313
    %1315 = vst.msk [vmem:[%s533] sm:$0xff] %vm123, %v1314
    %1316 = vst.msk [vmem:[%s535] sm:$0xff] %vm124, %v1314
    %v1317 = vld [vmem:[%s537] sm:$0xff]
    %v1318 = vld [vmem:[%s539] sm:$0xff]
    %v1319 = vsel %vm123, %v1317, %v1318
    %1320 = vmatprep.subr.mxu0 0.0
    %1321 = vmatpush1.msra.mxu0 %v950
    %1322 = vmatprep.subr.mxu0 0.0
    %1323 = vmatpush1.msra.mxu0 %v951
    %1324 = vmatprep.subr.mxu0 0.0
    %1325 = vmatpush1.msra.mxu0 %v952
    %1326 = vmatprep.subr.mxu0 0.0
    %1327 = vmatpush1.msra.mxu0 %v953
    %1328 = vmatprep.subr.mxu0 0.0
    %1329 = vmatpush1.msra.mxu0 %v954
    %1330 = vmatprep.subr.mxu0 0.0
    %1331 = vmatpush1.msra.mxu0 %v955
    %1332 = vmatprep.subr.mxu0 0.0
    %1333 = vmatpush1.msra.mxu0 %v956
    %1334 = vmatprep.subr.mxu0 0.0
    %1335 = vmatpush1.msra.mxu0 %v957
    %1336 = vmatprep.subr.mxu0 0.0
    %1337 = vmatpush1.msra.mxu0 %v958
    %1338 = vmatprep.subr.mxu0 0.0
    %1339 = vmatpush1.msra.mxu0 %v959
    %1340 = vmatprep.subr.mxu0 0.0
    %1341 = vmatpush1.msra.mxu0 %v960
    %1342 = vmatprep.subr.mxu0 0.0
    %1343 = vmatpush1.msra.mxu0 %v961
    %1344 = vmatprep.subr.mxu0 0.0
    %1345 = vmatpush1.msra.mxu0 %v962
    %1346 = vmatprep.subr.mxu0 0.0
    %1347 = vmatpush1.msra.mxu0 %v963
    %1348 = vmatprep.subr.mxu0 0.0
    %1349 = vmatpush1.msra.mxu0 %v964
    %1350 = vmatprep.subr.mxu0 0.0
    %1351 = vmatpush1.msra.mxu0 %v965
    %1352 = vmatprep.subr.mxu0 0.0
    %1353 = vmatpush1.msra.mxu0 0.0
    %1354 = vmatprep.subr.mxu0 0.0
    %1355 = vmatpush1.msra.mxu0 0.0
    %1356 = vmatprep.subr.mxu0 0.0
    %1357 = vmatpush1.msra.mxu0 0.0
    %1358 = vmatprep.subr.mxu0 0.0
    %1359 = vmatpush1.msra.mxu0 0.0
    %1360 = vmatprep.subr.mxu0 0.0
    %1361 = vmatpush1.msra.mxu0 0.0
    %1362 = vmatprep.subr.mxu0 0.0
    %1363 = vmatpush1.msra.mxu0 0.0
    %1364 = vmatprep.subr.mxu0 0.0
    %1365 = vmatpush1.msra.mxu0 0.0
    %1366 = vmatprep.subr.mxu0 0.0
    %1367 = vmatpush1.msra.mxu0 0.0
    %1368 = vmatprep.subr.mxu0 0.0
    %1369 = vmatpush1.msra.mxu0 0.0
    %1370 = vmatprep.subr.mxu0 0.0
    %1371 = vmatpush1.msra.mxu0 0.0
    %1372 = vmatprep.subr.mxu0 0.0
    %1373 = vmatpush1.msra.mxu0 0.0
    %1374 = vmatprep.subr.mxu0 0.0
    %1375 = vmatpush1.msra.mxu0 0.0
    %1376 = vmatprep.subr.mxu0 0.0
    %1377 = vmatpush1.msra.mxu0 0.0
    %1378 = vmatprep.subr.mxu0 0.0
    %1379 = vmatpush1.msra.mxu0 0.0
    %1380 = vmatprep.subr.mxu0 0.0
    %1381 = vmatpush1.msra.mxu0 0.0
    %1382 = vmatprep.subr.mxu0 0.0
    %1383 = vmatpush1.msra.mxu0 0.0
    %1384 = vmatprep.mubr.f32.mxu0 0.0
    %1385 = vmatmul.mubr.f32.gmra.mrb[0].mxu0 %v1314
    %v1386 = vpop.f32.mrb[0].mxu0
    %v1387 = vadd.f32 0.0, %v1386
    %v1388 = vpop.f32.mrb[0].mxu0
    %1389 = vdwg.mxu0
    %v1390 = vadd.f32 %v1319, %v1387
    %v1391 = vtanh.pop %v1390
    %1392 = vst.msk [vmem:[%s614] sm:$0xff] %vm123, %v1391
    %1393 = vst.msk [vmem:[%s616] sm:$0xff] %vm124, %v1391
    %v1394 = vld [vmem:[%s539] sm:$0xff]
    %v1395 = vld [vmem:[%s537] sm:$0xff]
    %v1396 = vsel %vm123, %v1394, %v1395
    %1397 = vmatprep.subr.mxu0 0.0
    %1398 = vmatpush1.msra.mxu0 %v950
    %1399 = vmatprep.subr.mxu0 0.0
    %1400 = vmatpush1.msra.mxu0 %v951
    %1401 = vmatprep.subr.mxu0 0.0
    %1402 = vmatpush1.msra.mxu0 %v952
    %1403 = vmatprep.subr.mxu0 0.0
    %1404 = vmatpush1.msra.mxu0 %v953
    %1405 = vmatprep.subr.mxu0 0.0
    %1406 = vmatpush1.msra.mxu0 %v954
    %1407 = vmatprep.subr.mxu0 0.0
    %1408 = vmatpush1.msra.mxu0 %v955
    %1409 = vmatprep.subr.mxu0 0.0
    %1410 = vmatpush1.msra.mxu0 %v956
    %1411 = vmatprep.subr.mxu0 0.0
    %1412 = vmatpush1.msra.mxu0 %v957
    %1413 = vmatprep.subr.mxu0 0.0
    %1414 = vmatpush1.msra.mxu0 %v958
    %1415 = vmatprep.subr.mxu0 0.0
    %1416 = vmatpush1.msra.mxu0 %v959
    %1417 = vmatprep.subr.mxu0 0.0
    %1418 = vmatpush1.msra.mxu0 %v960
    %1419 = vmatprep.subr.mxu0 0.0
    %1420 = vmatpush1.msra.mxu0 %v961
    %1421 = vmatprep.subr.mxu0 0.0
    %1422 = vmatpush1.msra.mxu0 %v962
    %1423 = vmatprep.subr.mxu0 0.0
    %1424 = vmatpush1.msra.mxu0 %v963
    %1425 = vmatprep.subr.mxu0 0.0
    %1426 = vmatpush1.msra.mxu0 %v964
    %1427 = vmatprep.subr.mxu0 0.0
    %1428 = vmatpush1.msra.mxu0 %v965
    %1429 = vmatprep.subr.mxu0 0.0
    %1430 = vmatpush1.msra.mxu0 0.0
    %1431 = vmatprep.subr.mxu0 0.0
    %1432 = vmatpush1.msra.mxu0 0.0
    %1433 = vmatprep.subr.mxu0 0.0
    %1434 = vmatpush1.msra.mxu0 0.0
    %1435 = vmatprep.subr.mxu0 0.0
    %1436 = vmatpush1.msra.mxu0 0.0
    %1437 = vmatprep.subr.mxu0 0.0
    %1438 = vmatpush1.msra.mxu0 0.0
    %1439 = vmatprep.subr.mxu0 0.0
    %1440 = vmatpush1.msra.mxu0 0.0
    %1441 = vmatprep.subr.mxu0 0.0
    %1442 = vmatpush1.msra.mxu0 0.0
    %1443 = vmatprep.subr.mxu0 0.0
    %1444 = vmatpush1.msra.mxu0 0.0
    %1445 = vmatprep.subr.mxu0 0.0
    %1446 = vmatpush1.msra.mxu0 0.0
    %1447 = vmatprep.subr.mxu0 0.0
    %1448 = vmatpush1.msra.mxu0 0.0
    %1449 = vmatprep.subr.mxu0 0.0
    %1450 = vmatpush1.msra.mxu0 0.0
    %1451 = vmatprep.subr.mxu0 0.0
    %1452 = vmatpush1.msra.mxu0 0.0
    %1453 = vmatprep.subr.mxu0 0.0
    %1454 = vmatpush1.msra.mxu0 0.0
    %1455 = vmatprep.subr.mxu0 0.0
    %1456 = vmatpush1.msra.mxu0 0.0
    %1457 = vmatprep.subr.mxu0 0.0
    %1458 = vmatpush1.msra.mxu0 0.0
    %1459 = vmatprep.subr.mxu0 0.0
    %1460 = vmatpush1.msra.mxu0 0.0
    %1461 = vmatprep.mubr.f32.mxu0 0.0
    %1462 = vmatmul.mubr.f32.gmra.mrb[0].mxu0 %v1391
    %v1463 = vpop.f32.mrb[0].mxu0
    %v1464 = vadd.f32 0.0, %v1463
    %v1465 = vpop.f32.mrb[0].mxu0
    %1466 = vdwg.mxu0
    %v1467 = vadd.f32 %v1396, %v1464
    %v1468 = vtanh.pop %v1467
    %1469 = vst.msk [vmem:[%s616] sm:$0xff] %vm123, %v1468
    %1470 = vst.msk [vmem:[%s614] sm:$0xff] %vm124, %v1468
    %v1471 = vld [vmem:[%s458] sm:$0xff]
    %v1472 = vld [vmem:[%s456] sm:$0xff]
    %v1473 = vsel %vm123, %v1471, %v1472
    %1474 = vmatprep.subr.mxu0 0.0
    %1475 = vmatpush1.msra.mxu0 %v950
    %1476 = vmatprep.subr.mxu0 0.0
    %1477 = vmatpush1.msra.mxu0 %v951
    %1478 = vmatprep.subr.mxu0 0.0
    %1479 = vmatpush1.msra.mxu0 %v952
    %1480 = vmatprep.subr.mxu0 0.0
    %1481 = vmatpush1.msra.mxu0 %v953
    %1482 = vmatprep.subr.mxu0 0.0
    %1483 = vmatpush1.msra.mxu0 %v954
    %1484 = vmatprep.subr.mxu0 0.0
    %1485 = vmatpush1.msra.mxu0 %v955
    %1486 = vmatprep.subr.mxu0 0.0
    %1487 = vmatpush1.msra.mxu0 %v956
    %1488 = vmatprep.subr.mxu0 0.0
    %1489 = vmatpush1.msra.mxu0 %v957
    %1490 = vmatprep.subr.mxu0 0.0
    %1491 = vmatpush1.msra.mxu0 %v958
    %1492 = vmatprep.subr.mxu0 0.0
    %1493 = vmatpush1.msra.mxu0 %v959
    %1494 = vmatprep.subr.mxu0 0.0
    %1495 = vmatpush1.msra.mxu0 %v960
    %1496 = vmatprep.subr.mxu0 0.0
    %1497 = vmatpush1.msra.mxu0 %v961
    %1498 = vmatprep.subr.mxu0 0.0
    %1499 = vmatpush1.msra.mxu0 %v962
    %1500 = vmatprep.subr.mxu0 0.0
    %1501 = vmatpush1.msra.mxu0 %v963
    %1502 = vmatprep.subr.mxu0 0.0
    %1503 = vmatpush1.msra.mxu0 %v964
    %1504 = vmatprep.subr.mxu0 0.0
    %1505 = vmatpush1.msra.mxu0 %v965
    %1506 = vmatprep.subr.mxu0 0.0
    %1507 = vmatpush1.msra.mxu0 0.0
    %1508 = vmatprep.subr.mxu0 0.0
    %1509 = vmatpush1.msra.mxu0 0.0
    %1510 = vmatprep.subr.mxu0 0.0
    %1511 = vmatpush1.msra.mxu0 0.0
    %1512 = vmatprep.subr.mxu0 0.0
    %1513 = vmatpush1.msra.mxu0 0.0
    %1514 = vmatprep.subr.mxu0 0.0
    %1515 = vmatpush1.msra.mxu0 0.0
    %1516 = vmatprep.subr.mxu0 0.0
    %1517 = vmatpush1.msra.mxu0 0.0
    %1518 = vmatprep.subr.mxu0 0.0
    %1519 = vmatpush1.msra.mxu0 0.0
    %1520 = vmatprep.subr.mxu0 0.0
    %1521 = vmatpush1.msra.mxu0 0.0
    %1522 = vmatprep.subr.mxu0 0.0
    %1523 = vmatpush1.msra.mxu0 0.0
    %1524 = vmatprep.subr.mxu0 0.0
    %1525 = vmatpush1.msra.mxu0 0.0
    %1526 = vmatprep.subr.mxu0 0.0
    %1527 = vmatpush1.msra.mxu0 0.0
    %1528 = vmatprep.subr.mxu0 0.0
    %1529 = vmatpush1.msra.mxu0 0.0
    %1530 = vmatprep.subr.mxu0 0.0
    %1531 = vmatpush1.msra.mxu0 0.0
    %1532 = vmatprep.subr.mxu0 0.0
    %1533 = vmatpush1.msra.mxu0 0.0
    %1534 = vmatprep.subr.mxu0 0.0
    %1535 = vmatpush1.msra.mxu0 0.0
    %1536 = vmatprep.subr.mxu0 0.0
    %1537 = vmatpush1.msra.mxu0 0.0
    %1538 = vmatprep.mubr.f32.mxu0 0.0
    %1539 = vmatmul.mubr.f32.gmra.mrb[0].mxu0 %v1468
    %v1540 = vpop.f32.mrb[0].mxu0
    %v1541 = vadd.f32 0.0, %v1540
    %v1542 = vpop.f32.mrb[0].mxu0
    %1543 = vdwg.mxu0
    %v1544 = vadd.f32 %v1473, %v1541
    %v1545 = vtanh.pop %v1544
    %1546 = vst.msk [vmem:[%s535] sm:$0xff] %vm123, %v1545
    %1547 = vst.msk [vmem:[%s533] sm:$0xff] %vm124, %v1545
    %v1548 = vld [vmem:[%s377] sm:$0xff]
    %v1549 = vld [vmem:[%s375] sm:$0xff]
    %v1550 = vsel %vm123, %v1548, %v1549
    %1551 = vmatprep.subr.mxu0 0.0
    %1552 = vmatpush1.msra.mxu0 %v950
    %1553 = vmatprep.subr.mxu0 0.0
    %1554 = vmatpush1.msra.mxu0 %v951
    %1555 = vmatprep.subr.mxu0 0.0
    %1556 = vmatpush1.msra.mxu0 %v952
    %1557 = vmatprep.subr.mxu0 0.0
    %1558 = vmatpush1.msra.mxu0 %v953
    %1559 = vmatprep.subr.mxu0 0.0
    %1560 = vmatpush1.msra.mxu0 %v954
    %1561 = vmatprep.subr.mxu0 0.0
    %1562 = vmatpush1.msra.mxu0 %v955
    %1563 = vmatprep.subr.mxu0 0.0
    %1564 = vmatpush1.msra.mxu0 %v956
    %1565 = vmatprep.subr.mxu0 0.0
    %1566 = vmatpush1.msra.mxu0 %v957
    %1567 = vmatprep.subr.mxu0 0.0
    %1568 = vmatpush1.msra.mxu0 %v958
    %1569 = vmatprep.subr.mxu0 0.0
    %1570 = vmatpush1.msra.mxu0 %v959
    %1571 = vmatprep.subr.mxu0 0.0
    %1572 = vmatpush1.msra.mxu0 %v960
    %1573 = vmatprep.subr.mxu0 0.0
    %1574 = vmatpush1.msra.mxu0 %v961
    %1575 = vmatprep.subr.mxu0 0.0
    %1576 = vmatpush1.msra.mxu0 %v962
    %1577 = vmatprep.subr.mxu0 0.0
    %1578 = vmatpush1.msra.mxu0 %v963
    %1579 = vmatprep.subr.mxu0 0.0
    %1580 = vmatpush1.msra.mxu0 %v964
    %1581 = vmatprep.subr.mxu0 0.0
    %1582 = vmatpush1.msra.mxu0 %v965
    %1583 = vmatprep.subr.mxu0 0.0
    %1584 = vmatpush1.msra.mxu0 0.0
    %1585 = vmatprep.subr.mxu0 0.0
    %1586 = vmatpush1.msra.mxu0 0.0
    %1587 = vmatprep.subr.mxu0 0.0
    %1588 = vmatpush1.msra.mxu0 0.0
    %1589 = vmatprep.subr.mxu0 0.0
    %1590 = vmatpush1.msra.mxu0 0.0
    %1591 = vmatprep.subr.mxu0 0.0
    %1592 = vmatpush1.msra.mxu0 0.0
    %1593 = vmatprep.subr.mxu0 0.0
    %1594 = vmatpush1.msra.mxu0 0.0
    %1595 = vmatprep.subr.mxu0 0.0
    %1596 = vmatpush1.msra.mxu0 0.0
    %1597 = vmatprep.subr.mxu0 0.0
    %1598 = vmatpush1.msra.mxu0 0.0
    %1599 = vmatprep.subr.mxu0 0.0
    %1600 = vmatpush1.msra.mxu0 0.0
    %1601 = vmatprep.subr.mxu0 0.0
    %1602 = vmatpush1.msra.mxu0 0.0
    %1603 = vmatprep.subr.mxu0 0.0
    %1604 = vmatpush1.msra.mxu0 0.0
    %1605 = vmatprep.subr.mxu0 0.0
    %1606 = vmatpush1.msra.mxu0 0.0
    %1607 = vmatprep.subr.mxu0 0.0
    %1608 = vmatpush1.msra.mxu0 0.0
    %1609 = vmatprep.subr.mxu0 0.0
    %1610 = vmatpush1.msra.mxu0 0.0
    %1611 = vmatprep.subr.mxu0 0.0
    %1612 = vmatpush1.msra.mxu0 0.0
    %1613 = vmatprep.subr.mxu0 0.0
    %1614 = vmatpush1.msra.mxu0 0.0
    %1615 = vmatprep.mubr.f32.mxu0 0.0
    %1616 = vmatmul.mubr.f32.gmra.mrb[0].mxu0 %v1545
    %v1617 = vpop.f32.mrb[0].mxu0
    %v1618 = vadd.f32 0.0, %v1617
    %v1619 = vpop.f32.mrb[0].mxu0
    %1620 = vdwg.mxu0
    %v1621 = vadd.f32 %v1550, %v1618
    %v1622 = vtanh.pop %v1621
    %1623 = vst.msk [vmem:[%s454] sm:$0xff] %vm123, %v1622
    %1624 = vst.msk [vmem:[%s452] sm:$0xff] %vm124, %v1622
    %v1625 = vld [vmem:[%s297] sm:$0xff]
    %v1626 = vld [vmem:[#allocation2] sm:$0xff]
    %v1627 = vsel %vm123, %v1625, %v1626
    %1628 = vmatprep.subr.mxu0 0.0
    %1629 = vmatpush1.msra.mxu0 %v950
    %1630 = vmatprep.subr.mxu0 0.0
    %1631 = vmatpush1.msra.mxu0 %v951
    %1632 = vmatprep.subr.mxu0 0.0
    %1633 = vmatpush1.msra.mxu0 %v952
    %1634 = vmatprep.subr.mxu0 0.0
    %1635 = vmatpush1.msra.mxu0 %v953
    %1636 = vmatprep.subr.mxu0 0.0
    %1637 = vmatpush1.msra.mxu0 %v954
    %1638 = vmatprep.subr.mxu0 0.0
    %1639 = vmatpush1.msra.mxu0 %v955
    %1640 = vmatprep.subr.mxu0 0.0
    %1641 = vmatpush1.msra.mxu0 %v956
    %1642 = vmatprep.subr.mxu0 0.0
    %1643 = vmatpush1.msra.mxu0 %v957
    %1644 = vmatprep.subr.mxu0 0.0
    %1645 = vmatpush1.msra.mxu0 %v958
    %1646 = vmatprep.subr.mxu0 0.0
    %1647 = vmatpush1.msra.mxu0 %v959
    %1648 = vmatprep.subr.mxu0 0.0
    %1649 = vmatpush1.msra.mxu0 %v960
    %1650 = vmatprep.subr.mxu0 0.0
    %1651 = vmatpush1.msra.mxu0 %v961
    %1652 = vmatprep.subr.mxu0 0.0
    %1653 = vmatpush1.msra.mxu0 %v962
    %1654 = vmatprep.subr.mxu0 0.0
    %1655 = vmatpush1.msra.mxu0 %v963
    %1656 = vmatprep.subr.mxu0 0.0
    %1657 = vmatpush1.msra.mxu0 %v964
    %1658 = vmatprep.subr.mxu0 0.0
    %1659 = vmatpush1.msra.mxu0 %v965
    %1660 = vmatprep.subr.mxu0 0.0
    %1661 = vmatpush1.msra.mxu0 0.0
    %1662 = vmatprep.subr.mxu0 0.0
    %1663 = vmatpush1.msra.mxu0 0.0
    %1664 = vmatprep.subr.mxu0 0.0
    %1665 = vmatpush1.msra.mxu0 0.0
    %1666 = vmatprep.subr.mxu0 0.0
    %1667 = vmatpush1.msra.mxu0 0.0
    %1668 = vmatprep.subr.mxu0 0.0
    %1669 = vmatpush1.msra.mxu0 0.0
    %1670 = vmatprep.subr.mxu0 0.0
    %1671 = vmatpush1.msra.mxu0 0.0
    %1672 = vmatprep.subr.mxu0 0.0
    %1673 = vmatpush1.msra.mxu0 0.0
    %1674 = vmatprep.subr.mxu0 0.0
    %1675 = vmatpush1.msra.mxu0 0.0
    %1676 = vmatprep.subr.mxu0 0.0
    %1677 = vmatpush1.msra.mxu0 0.0
    %1678 = vmatprep.subr.mxu0 0.0
    %1679 = vmatpush1.msra.mxu0 0.0
    %1680 = vmatprep.subr.mxu0 0.0
    %1681 = vmatpush1.msra.mxu0 0.0
    %1682 = vmatprep.subr.mxu0 0.0
    %1683 = vmatpush1.msra.mxu0 0.0
    %1684 = vmatprep.subr.mxu0 0.0
    %1685 = vmatpush1.msra.mxu0 0.0
    %1686 = vmatprep.subr.mxu0 0.0
    %1687 = vmatpush1.msra.mxu0 0.0
    %1688 = vmatprep.subr.mxu0 0.0
    %1689 = vmatpush1.msra.mxu0 0.0
    %1690 = vmatprep.subr.mxu0 0.0
    %1691 = vmatpush1.msra.mxu0 0.0
    %1692 = vmatprep.mubr.f32.mxu0 0.0
    %1693 = vmatmul.mubr.f32.gmra.mrb[0].mxu0 %v1622
    %v1694 = vpop.f32.mrb[0].mxu0
    %v1695 = vadd.f32 0.0, %v1694
    %v1696 = vpop.f32.mrb[0].mxu0
    %1697 = vdwg.mxu0
    %v1698 = vadd.f32 %v1627, %v1695
    %v1699 = vtanh.pop %v1698
    %1700 = vst.msk [vmem:[%s373] sm:$0xff] %vm123, %v1699
    %1701 = vst.msk [vmem:[#allocation3] sm:$0xff] %vm124, %v1699
    %v1702 = vld [vmem:[#allocation3] sm:$0xff]
    %v1703 = vld [vmem:[#allocation3 + $0x8] sm:$0xff]
    %v1704 = vld [vmem:[#allocation3 + $0x10] sm:$0xff]
    %v1705 = vld [vmem:[#allocation3 + $0x18] sm:$0xff]
    %v1706 = vld [vmem:[#allocation3 + $0x20] sm:$0xff]
    %v1707 = vld [vmem:[#allocation3 + $0x28] sm:$0xff]
    %v1708 = vld [vmem:[#allocation3 + $0x30] sm:$0xff]
    %v1709 = vld [vmem:[#allocation3 + $0x38] sm:$0xff]
    %v1710 = vld [vmem:[#allocation12] sm:$0xff]
    %v1711 = vld [vmem:[#allocation12 + $0x8] sm:$0xff]
    %v1712 = vld [vmem:[#allocation12 + $0x10] sm:$0xff]
    %v1713 = vld [vmem:[#allocation12 + $0x18] sm:$0xff]
    %v1714 = vld [vmem:[#allocation12 + $0x20] sm:$0xff]
    %v1715 = vld [vmem:[#allocation12 + $0x28] sm:$0xff]
    %v1716 = vld [vmem:[#allocation12 + $0x30] sm:$0xff]
    %v1717 = vld [vmem:[#allocation12 + $0x38] sm:$0xff]
    %v1718 = vld [vmem:[#allocation12 + $0x40] sm:$0xff]
    %v1719 = vld [vmem:[#allocation12 + $0x48] sm:$0xff]
    %v1720 = vld [vmem:[#allocation12 + $0x50] sm:$0xff]
    %v1721 = vld [vmem:[#allocation12 + $0x58] sm:$0xff]
    %v1722 = vld [vmem:[#allocation12 + $0x60] sm:$0xff]
    %v1723 = vld [vmem:[#allocation12 + $0x68] sm:$0xff]
    %v1724 = vld [vmem:[#allocation12 + $0x70] sm:$0xff]
    %v1725 = vld [vmem:[#allocation12 + $0x78] sm:$0xff]
    %v1726 = vld [vmem:[#allocation14] sm:$0x1]
    %v1728 = vlaneseq
    %v1729 = vshrl.u32 %v1728, 7
    %v1730 = vsub.s32 0, %v1729
    %v1731 = vrot.slane %v1726, %v1730
    %1733 = vmatprep.subr.mxu0 0.0
    %1734 = vmatpush1.msra.mxu0 %v1710
    %1735 = vmatprep.subr.mxu0 0.0
    %1736 = vmatpush1.msra.mxu0 %v1711
    %1737 = vmatprep.subr.mxu0 0.0
    %1738 = vmatpush1.msra.mxu0 %v1712
    %1739 = vmatprep.subr.mxu0 0.0
    %1740 = vmatpush1.msra.mxu0 %v1713
    %1741 = vmatprep.subr.mxu0 0.0
    %1742 = vmatpush1.msra.mxu0 %v1714
    %1743 = vmatprep.subr.mxu0 0.0
    %1744 = vmatpush1.msra.mxu0 %v1715
    %1745 = vmatprep.subr.mxu0 0.0
    %1746 = vmatpush1.msra.mxu0 %v1716
    %1747 = vmatprep.subr.mxu0 0.0
    %1748 = vmatpush1.msra.mxu0 %v1717
    %1749 = vmatprep.subr.mxu0 0.0
    %1750 = vmatpush1.msra.mxu0 %v1718
    %1751 = vmatprep.subr.mxu0 0.0
    %1752 = vmatpush1.msra.mxu0 %v1719
    %1753 = vmatprep.subr.mxu0 0.0
    %1754 = vmatpush1.msra.mxu0 %v1720
    %1755 = vmatprep.subr.mxu0 0.0
    %1756 = vmatpush1.msra.mxu0 %v1721
    %1757 = vmatprep.subr.mxu0 0.0
    %1758 = vmatpush1.msra.mxu0 %v1722
    %1759 = vmatprep.subr.mxu0 0.0
    %1760 = vmatpush1.msra.mxu0 %v1723
    %1761 = vmatprep.subr.mxu0 0.0
    %1762 = vmatpush1.msra.mxu0 %v1724
    %1763 = vmatprep.subr.mxu0 0.0
    %1764 = vmatpush1.msra.mxu0 %v1725
    %1765 = vmatprep.subr.mxu0 0.0
    %1766 = vmatpush1.msra.mxu0 0.0
    %1767 = vmatprep.subr.mxu0 0.0
    %1768 = vmatpush1.msra.mxu0 0.0
    %1769 = vmatprep.subr.mxu0 0.0
    %1770 = vmatpush1.msra.mxu0 0.0
    %1771 = vmatprep.subr.mxu0 0.0
    %1772 = vmatpush1.msra.mxu0 0.0
    %1773 = vmatprep.subr.mxu0 0.0
    %1774 = vmatpush1.msra.mxu0 0.0
    %1775 = vmatprep.subr.mxu0 0.0
    %1776 = vmatpush1.msra.mxu0 0.0
    %1777 = vmatprep.subr.mxu0 0.0
    %1778 = vmatpush1.msra.mxu0 0.0
    %1779 = vmatprep.subr.mxu0 0.0
    %1780 = vmatpush1.msra.mxu0 0.0
    %1781 = vmatprep.subr.mxu0 0.0
    %1782 = vmatpush1.msra.mxu0 0.0
    %1783 = vmatprep.subr.mxu0 0.0
    %1784 = vmatpush1.msra.mxu0 0.0
    %1785 = vmatprep.subr.mxu0 0.0
    %1786 = vmatpush1.msra.mxu0 0.0
    %1787 = vmatprep.subr.mxu0 0.0
    %1788 = vmatpush1.msra.mxu0 0.0
    %1789 = vmatprep.subr.mxu0 0.0
    %1790 = vmatpush1.msra.mxu0 0.0
    %1791 = vmatprep.subr.mxu0 0.0
    %1792 = vmatpush1.msra.mxu0 0.0
    %1793 = vmatprep.subr.mxu0 0.0
    %1794 = vmatpush1.msra.mxu0 0.0
    %1795 = vmatprep.subr.mxu0 0.0
    %1796 = vmatpush1.msra.mxu0 0.0
    %1797 = vmatprep.mubr.f32.mxu0 0.0
    %1798 = vmatmul.mubr.f32.gmra.mrb[0].mxu0 %v1702
    %v1799 = vpop.f32.mrb[0].mxu0
    %v1800 = vadd.f32 %v1731, %v1799
    %v1801 = vpop.f32.mrb[0].mxu0
    %1802 = vmatprep.mubr.f32.mxu0 0.0
    %1803 = vmatmul.mubr.f32.gmra.mrb[0].mxu0 %v1703
    %v1804 = vpop.f32.mrb[0].mxu0
    %v1805 = vadd.f32 %v1731, %v1804
    %v1806 = vpop.f32.mrb[0].mxu0
    %1807 = vmatprep.mubr.f32.mxu0 0.0
    %1808 = vmatmul.mubr.f32.gmra.mrb[0].mxu0 %v1704
    %v1809 = vpop.f32.mrb[0].mxu0
    %v1810 = vadd.f32 %v1731, %v1809
    %v1811 = vpop.f32.mrb[0].mxu0
    %1812 = vmatprep.mubr.f32.mxu0 0.0
    %1813 = vmatmul.mubr.f32.gmra.mrb[0].mxu0 %v1705
    %v1814 = vpop.f32.mrb[0].mxu0
    %v1815 = vadd.f32 %v1731, %v1814
    %v1816 = vpop.f32.mrb[0].mxu0
    %1817 = vmatprep.mubr.f32.mxu0 0.0
    %1818 = vmatmul.mubr.f32.gmra.mrb[0].mxu0 %v1706
    %v1819 = vpop.f32.mrb[0].mxu0
    %v1820 = vadd.f32 %v1731, %v1819
    %v1821 = vpop.f32.mrb[0].mxu0
    %1822 = vmatprep.mubr.f32.mxu0 0.0
    %1823 = vmatmul.mubr.f32.gmra.mrb[0].mxu0 %v1707
    %v1824 = vpop.f32.mrb[0].mxu0
    %v1825 = vadd.f32 %v1731, %v1824
    %v1826 = vpop.f32.mrb[0].mxu0
    %1827 = vmatprep.mubr.f32.mxu0 0.0
    %1828 = vmatmul.mubr.f32.gmra.mrb[0].mxu0 %v1708
    %v1829 = vpop.f32.mrb[0].mxu0
    %v1830 = vadd.f32 %v1731, %v1829
    %v1831 = vpop.f32.mrb[0].mxu0
    %1832 = vmatprep.mubr.f32.mxu0 0.0
    %1833 = vmatmul.mubr.f32.gmra.mrb[0].mxu0 %v1709
    %v1834 = vpop.f32.mrb[0].mxu0
    %v1835 = vadd.f32 %v1731, %v1834
    %v1836 = vpop.f32.mrb[0].mxu0
    %1837 = vdwg.mxu0
    %1838 = vst [vmem:[%s9] sm:$0xff] %v1800
    %1839 = vst [vmem:[%s9 + $0x8] sm:$0xff] %v1805
    %1840 = vst [vmem:[%s9 + $0x10] sm:$0xff] %v1810
    %1841 = vst [vmem:[%s9 + $0x18] sm:$0xff] %v1815
    %1842 = vst [vmem:[%s9 + $0x20] sm:$0xff] %v1820
    %1843 = vst [vmem:[%s9 + $0x28] sm:$0xff] %v1825
    %1844 = vst [vmem:[%s9 + $0x30] sm:$0xff] %v1830
    %1845 = vst [vmem:[%s9 + $0x38] sm:$0xff] %v1835
    // Predicated region
    $region66: #{rnn_classifier_forward.1} parent=1 // pred_check
      _
    $region67: #{rnn_classifier_forward.1} parent=1 // pred_check_branch
      %1847 = sbr.rel (0) target = $region69
    $region68: #{rnn_classifier_forward.1} parent=1 // pred_region
      _
    $region69: #{rnn_classifier_forward.1} parent=1 // pred_fallthru
      _
    // Predicated region
    $region70: #{rnn_classifier_forward.1} parent=1 // pred_check
      _
    $region71: #{rnn_classifier_forward.1} parent=1 // pred_check_branch
      %1849 = sbr.rel (0) target = $region73
    $region72: #{rnn_classifier_forward.1} parent=1 // pred_region
      _
    $region73: #{rnn_classifier_forward.1} parent=1 // pred_fallthru
      _
    %1850 = vsyncpa [#allocation5], 1
    %1851 = vsyncpa [#allocation7], 1
    %1852 = vsyncpa [#allocation10], 1
    %1853 = vsyncpa [#allocation13], 1

</llo_original>
